<compile_context>
chip_gen: v6e
topology: v6e:2x2x1
jax: 0.10.0
libtpu: 0.0.40
codegen_flags: <defaults>
</compile_context>

<pallas_src>
import jax
import jax.numpy as jnp
from jax.experimental import pallas as pl
from jax.experimental.pallas import tpu as pltpu


# ----------------------------- Pallas kernels -------------------------------


def stem_stats_kernel(patches_ref, stem_w_ref, y_ref, sum_ref, sumsq_ref):
    """Per-sample Stem conv (3x3 / stride2) + ReLU, plus running BN stats.

    patches_ref: [1, K, S]    im2col patches of sample n (K = Cin*9), bf16
    stem_w_ref:  [Cout, K]    stem conv weight, bf16
    y_ref:       [1, Cout, S] bf16 post-ReLU stem activation (pixel-major)
    sum_ref:     [Cout, 1]    f32 running sum over all N*S pixels (accumulator)
    sumsq_ref:   [Cout, 1]    f32 running sum of squares (accumulator)
    """
    n = pl.program_id(0)

    @pl.when(n == 0)
    def _():
        sum_ref[...] = jnp.zeros_like(sum_ref)
        sumsq_ref[...] = jnp.zeros_like(sumsq_ref)

    # [Cout, K] @ [K, S] -> [Cout, S], f32 accumulate on the MXU.
    y = jnp.dot(stem_w_ref[...], patches_ref[0],
                preferred_element_type=jnp.float32)
    # Stem order with first_layer_activation='relu': conv -> ReLU -> BN.
    y = jnp.maximum(y, 0.0)
    y_ref[0] = y.astype(y_ref.dtype)

    # Single-pass statistics (E[y], E[y^2]) accumulated across the sample
    # grid axis ("arbitrary"); finalized (mu / var / BN fold) in the wrapper.
    sum_ref[...] += jnp.sum(y, axis=1, keepdims=True)
    sumsq_ref[...] += jnp.sum(y * y, axis=1, keepdims=True)


def head_kernel(y_ref, w_ref, b_ref, up_ref, out_ref):
    """BN-folded LastLayer (1x1 conv) + per-sample 2x bilinear upsample.

    y_ref:   [1, Cout, S]   stem activation of sample n, bf16
    w_ref:   [NC, Cout]     last_w * bn_scale (BN folded), bf16
    b_ref:   [NC, 1]        last_w @ bn_shift, f32
    up_ref:  [S, 4*S]       shared 2x-bilinear upsample matrix, bf16
    out_ref: [1, NC, 4*S]   f32 output slab (lane-dense; epilogue = reshape)
    """
    # [NC, Cout] @ [Cout, S] + bias -> [NC, S]. BN normalization/affine is
    # folded into w_ref / b_ref, so there is no elementwise BN pass here.
    z = jnp.dot(w_ref[...], y_ref[0], preferred_element_type=jnp.float32)
    z = z + b_ref[...]
    # Shared per-sample upsample matmul: [NC, S] @ [S, 4S] -> [NC, 4S].
    out_ref[0] = jnp.dot(z.astype(up_ref.dtype), up_ref[...],
                         preferred_element_type=jnp.float32)


# --------------------------- wrapper / glue (jit) ----------------------------


def _im2col_s2_k3(x):
    """3x3 / stride-2 / pad-1 patches, per-sample contraction-major.

    x: [N, Cin, H, W] -> patches [N, Cin*9, OH*OW]
    (rows = (cin, kh, kw) taps matching PyTorch weight flattening;
     cols = (oh, ow) pixels -> kernel lane axis).
    """
    n, cin, h, w = x.shape
    oh = (h - 1) // 2 + 1
    ow = (w - 1) // 2 + 1
    xp = jnp.pad(x, ((0, 0), (0, 0), (1, 1), (1, 1)))
    taps = []
    for kh in range(3):
        for kw in range(3):
            taps.append(xp[:, :, kh:kh + 2 * oh:2, kw:kw + 2 * ow:2])
    p = jnp.stack(taps, axis=2)                 # [N, Cin, 9, OH, OW]
    return p.reshape(n, cin * 9, oh * ow), (oh, ow)


def _bilinear_up2_matrix(size_in):
    """1-D 2x bilinear upsample matrix [2*size_in, size_in].

    PyTorch nn.Upsample(scale_factor=2, mode='bilinear', align_corners=False)
    semantics (half-pixel centers, edge clamping). Weights are dyadic
    (0.25/0.75/1.0), exactly representable in bf16.
    """
    size_out = 2 * size_in
    o = jnp.arange(size_out, dtype=jnp.float32)
    src = (o + 0.5) * 0.5 - 0.5
    i0 = jnp.floor(src)
    frac = src - i0
    i0c = jnp.clip(i0.astype(jnp.int32), 0, size_in - 1)
    i1c = jnp.clip(i0.astype(jnp.int32) + 1, 0, size_in - 1)
    return ((1.0 - frac)[:, None] * jax.nn.one_hot(i0c, size_in, dtype=jnp.float32)
            + frac[:, None] * jax.nn.one_hot(i1c, size_in, dtype=jnp.float32))


@jax.jit
def network_forward(x, params):
    """Forward pass of `Network` for the configuration documented above."""
    n = x.shape[0]
    cout = params["stem_w"].shape[0]
    nc = params["last_w"].shape[0]

    # TODO(synk): `NetConstructor` cells and `BinASPP` are not provided; this
    # run uses network_sequence='' (no cells) and network_type != 'aspp', so
    # the cell loop and the ASPP branch are legitimately empty and scale == 2.
    # TODO(synk): `LastLayer` definition not provided; approximated as a plain
    # bias-free 1x1 conv to num_of_classes channels.
    # TODO(synk): `Bilinear` definition not provided; implemented as PyTorch
    # 2x bilinear upsample (align_corners=False) as a per-sample linear map.

    # im2col for the Stem conv (layout ops fuse under this jit).
    patches, (oh, ow) = _im2col_s2_k3(x)            # [N, K, S]
    k = patches.shape[1]
    s = oh * ow
    out_cols = 4 * s
    vmem_cap = 32 * 1024 * 1024

    # ---- kernel 1: stem conv + ReLU, BN batch statistics (accumulated) ----
    stem_w = params["stem_w"].reshape(cout, k).astype(jnp.bfloat16)
    y, ysum, ysumsq = pl.pallas_call(
        stem_stats_kernel,
        grid=(n,),
        in_specs=[
            pl.BlockSpec((1, k, s), lambda i: (i, 0, 0)),
            pl.BlockSpec((cout, k), lambda i: (0, 0)),
        ],
        out_specs=[
            pl.BlockSpec((1, cout, s), lambda i: (i, 0, 0)),
            pl.BlockSpec((cout, 1), lambda i: (0, 0)),
            pl.BlockSpec((cout, 1), lambda i: (0, 0)),
        ],
        out_shape=[
            jax.ShapeDtypeStruct((n, cout, s), jnp.bfloat16),
            jax.ShapeDtypeStruct((cout, 1), jnp.float32),
            jax.ShapeDtypeStruct((cout, 1), jnp.float32),
        ],
        compiler_params=pltpu.CompilerParams(
            dimension_semantics=("arbitrary",),     # stats accumulator
            vmem_limit_bytes=vmem_cap),
        cost_estimate=pl.CostEstimate(
            flops=2 * n * cout * k * s,
            transcendentals=0,
            bytes_accessed=(2 * n * k * s + 2 * cout * k
                            + 2 * n * cout * s + 8 * cout)),
    )(patches.astype(jnp.bfloat16), stem_w)

    # ---- fold BatchNorm2d (training-mode batch stats) into the last layer ---
    count = jnp.float32(n * s)
    mu = ysum[:, 0] / count
    var = jnp.maximum(ysumsq[:, 0] / count - mu * mu, 0.0)   # biased variance
    a = params["stem_gamma"] * jax.lax.rsqrt(var + 1e-5)     # [Cout]
    b = params["stem_beta"] - a * mu                         # [Cout]
    w_fold = (params["last_w"].astype(jnp.float32) * a[None, :]).astype(jnp.bfloat16)
    bias_fold = (params["last_w"].astype(jnp.float32) @ b).reshape(nc, 1)

    # Shared per-sample 2x bilinear upsample matrix [S, 4S].
    u_h = _bilinear_up2_matrix(oh)                           # [2*OH, OH]
    u_w = _bilinear_up2_matrix(ow)                           # [2*OW, OW]
    up = jnp.kron(u_h, u_w).T.astype(jnp.bfloat16)           # [S, 4*S]

    # ---- kernel 2: (BN-folded) LastLayer + upsample, grid over samples -----
    out = pl.pallas_call(
        head_kernel,
        grid=(n,),
        in_specs=[
            pl.BlockSpec((1, cout, s), lambda i: (i, 0, 0)),
            pl.BlockSpec((nc, cout), lambda i: (0, 0)),
            pl.BlockSpec((nc, 1), lambda i: (0, 0)),
            pl.BlockSpec((s, out_cols), lambda i: (0, 0)),
        ],
        out_specs=pl.BlockSpec((1, nc, out_cols), lambda i: (i, 0, 0)),
        out_shape=jax.ShapeDtypeStruct((n, nc, out_cols), jnp.float32),
        compiler_params=pltpu.CompilerParams(
            dimension_semantics=("parallel",),      # v7x: split over 2 TCs
            vmem_limit_bytes=vmem_cap),
        cost_estimate=pl.CostEstimate(
            flops=2 * n * nc * cout * s + 2 * n * nc * s * out_cols,
            transcendentals=0,
            bytes_accessed=(2 * n * cout * s + 2 * nc * cout + 4 * nc
                            + 2 * s * out_cols + 4 * n * nc * out_cols)),
    )(y, w_fold, bias_fold, up)

    # [N, NC, (2OH)*(2OW)] -> [N, NC, 2OH, 2OW]: pure reshape, no transpose.
    return out.reshape(n, nc, 2 * oh, 2 * ow)


# --------------------------------- main --------------------------------------

if __name__ == "__main__":
    key = jax.random.PRNGKey(0)
    k1, k2, k3 = jax.random.split(key, 3)

    # args-equivalent config (small, deterministic). img=32 keeps the
    # per-sample pixel count S = 256 lane-dense.
    batch, in_ch, img = 2, 3, 32
    stem_channels = 16
    num_classes = 8

    # Deterministic parameter init (shapes follow the module __init__).
    fan_in = in_ch * 3 * 3
    bound = (1.0 / fan_in) ** 0.5
    params = {
        # Conv2d(3, stem_channels, 3, stride=2, pad=1, bias=False)
        "stem_w": jax.random.uniform(k1, (stem_channels, in_ch, 3, 3),
                                     jnp.float32, -bound, bound),
        # BatchNorm2d(stem_channels, affine=True): PyTorch default weight=1, bias=0
        "stem_gamma": jnp.ones((stem_channels,), jnp.float32),
        "stem_beta": jnp.zeros((stem_channels,), jnp.float32),
        # LastLayer (approx 1x1 conv): [num_classes, stem_channels]
        "last_w": jax.random.uniform(k2, (num_classes, stem_channels),
                                     jnp.float32,
                                     -(1.0 / stem_channels) ** 0.5,
                                     (1.0 / stem_channels) ** 0.5),
    }

    x = jax.random.normal(k3, (batch, in_ch, img, img), jnp.float32)

    out = network_forward(x, params)
    out = jax.block_until_ready(out)
    assert out.shape == (batch, num_classes, img, img), out.shape
    assert jnp.all(jnp.isfinite(out))
    print("KERNEL_OK")
</pallas_src>

<mosaic_0001>
module attributes {stable_mosaic.version = 11 : i64} {
  func.func @stem_stats_kernel(%arg0: i32, %arg1: memref<1x27x256xbf16, #tpu.memory_space<vmem>>, %arg2: memref<16x27xbf16, #tpu.memory_space<vmem>>, %arg3: memref<1x16x256xbf16, #tpu.memory_space<vmem>>, %arg4: memref<16x1xf32, #tpu.memory_space<vmem>>, %arg5: memref<16x1xf32, #tpu.memory_space<vmem>>) attributes {dimension_semantics = [#tpu.dimension_semantics<arbitrary>], iteration_bounds = array<i64: 2>, scalar_prefetch = 0 : i64, scratch_operands = 0 : i64, tpu.core_type = #tpu.core_type<tc>, window_params = [{transform_indices = @transform_0, window_bounds = array<i64: 1, 27, 256>}, {pipeline_mode = #tpu.pipeline_mode<synchronous>, transform_indices = @transform_1, window_bounds = array<i64: 16, 27>}, {transform_indices = @transform_2, window_bounds = array<i64: 1, 16, 256>}, {pipeline_mode = #tpu.pipeline_mode<synchronous>, transform_indices = @transform_3, window_bounds = array<i64: 16, 1>}, {pipeline_mode = #tpu.pipeline_mode<synchronous>, transform_indices = @transform_4, window_bounds = array<i64: 16, 1>}]} {
    %c0_i32 = arith.constant 0 : i32
    %0 = arith.cmpi eq, %arg0, %c0_i32 : i32
    %1 = arith.extui %0 : i1 to i32
    %c0_i32_0 = arith.constant 0 : i32
    %2 = arith.cmpi ne, %1, %c0_i32_0 : i32
    scf.if %2 {
      %cst_19 = arith.constant 0.000000e+00 : f32
      %24 = vector.broadcast %cst_19 : f32 to vector<16x1xf32>
      %c0_20 = arith.constant 0 : index
      %c0_21 = arith.constant 0 : index
      %25 = vector.load %arg4[%c0_20, %c0_21] : memref<16x1xf32, #tpu.memory_space<vmem>>, vector<16x1xf32>
      tpu.vector_store %arg4[%c0_20, %c0_21], %24 {strides = array<i32>} : memref<16x1xf32, #tpu.memory_space<vmem>>, vector<16x1xf32>,
      %cst_22 = arith.constant 0.000000e+00 : f32
      %26 = vector.broadcast %cst_22 : f32 to vector<16x1xf32>
      %c0_23 = arith.constant 0 : index
      %c0_24 = arith.constant 0 : index
      %27 = vector.load %arg5[%c0_23, %c0_24] : memref<16x1xf32, #tpu.memory_space<vmem>>, vector<16x1xf32>
      tpu.vector_store %arg5[%c0_23, %c0_24], %26 {strides = array<i32>} : memref<16x1xf32, #tpu.memory_space<vmem>>, vector<16x1xf32>,
    } else {
    }
    %c0 = arith.constant 0 : index
    %c0_1 = arith.constant 0 : index
    %3 = vector.load %arg2[%c0, %c0_1] : memref<16x27xbf16, #tpu.memory_space<vmem>>, vector<16x27xbf16>
    %c0_2 = arith.constant 0 : index
    %c0_3 = arith.constant 0 : index
    %c0_4 = arith.constant 0 : index
    %4 = vector.load %arg1[%c0_2, %c0_3, %c0_4] : memref<1x27x256xbf16, #tpu.memory_space<vmem>>, vector<1x27x256xbf16>
    %5 = vector.shape_cast %4 : vector<1x27x256xbf16> to vector<27x256xbf16>
    %cst = arith.constant dense<0.000000e+00> : vector<16x256xf32>
    %6 = tpu.matmul %3, %5, %cst {dimension_numbers = #tpu.dot_dimension_numbers<[1], [0], [0], [1], [0, 0, 1, 1], [], []>} : vector<16x27xbf16>, vector<27x256xbf16>, vector<16x256xf32> -> vector<16x256xf32>
    %cst_5 = arith.constant 0.000000e+00 : f32
    %7 = vector.broadcast %cst_5 : f32 to vector<16x256xf32>
    %8 = arith.maximumf %6, %7 : vector<16x256xf32>
    %9 = arith.truncf %8 : vector<16x256xf32> to vector<16x256xbf16>
    %c0_6 = arith.constant 0 : index
    %c0_7 = arith.constant 0 : index
    %c0_8 = arith.constant 0 : index
    %10 = vector.load %arg3[%c0_6, %c0_7, %c0_8] : memref<1x16x256xbf16, #tpu.memory_space<vmem>>, vector<1x16x256xbf16>
    %11 = vector.shape_cast %10 : vector<1x16x256xbf16> to vector<16x256xbf16>
    %12 = vector.shape_cast %9 : vector<16x256xbf16> to vector<1x16x256xbf16>
    tpu.vector_store %arg3[%c0_6, %c0_7, %c0_8], %12 {strides = array<i32>} : memref<1x16x256xbf16, #tpu.memory_space<vmem>>, vector<1x16x256xbf16>,
    %c0_9 = arith.constant 0 : index
    %c0_10 = arith.constant 0 : index
    %13 = vector.load %arg4[%c0_9, %c0_10] : memref<16x1xf32, #tpu.memory_space<vmem>>, vector<16x1xf32>
    %cst_11 = arith.constant dense<0.000000e+00> : vector<16xf32>
    %14 = vector.multi_reduction <add>, %8, %cst_11 [1] : vector<16x256xf32> to vector<16xf32>
    %15 = vector.shape_cast %14 : vector<16xf32> to vector<16x1xf32>
    %16 = arith.addf %13, %15 : vector<16x1xf32>
    %c0_12 = arith.constant 0 : index
    %c0_13 = arith.constant 0 : index
    %17 = vector.load %arg4[%c0_12, %c0_13] : memref<16x1xf32, #tpu.memory_space<vmem>>, vector<16x1xf32>
    tpu.vector_store %arg4[%c0_12, %c0_13], %16 {strides = array<i32>} : memref<16x1xf32, #tpu.memory_space<vmem>>, vector<16x1xf32>,
    %c0_14 = arith.constant 0 : index
    %c0_15 = arith.constant 0 : index
    %18 = vector.load %arg5[%c0_14, %c0_15] : memref<16x1xf32, #tpu.memory_space<vmem>>, vector<16x1xf32>
    %19 = arith.mulf %8, %8 : vector<16x256xf32>
    %cst_16 = arith.constant dense<0.000000e+00> : vector<16xf32>
    %20 = vector.multi_reduction <add>, %19, %cst_16 [1] : vector<16x256xf32> to vector<16xf32>
    %21 = vector.shape_cast %20 : vector<16xf32> to vector<16x1xf32>
    %22 = arith.addf %18, %21 : vector<16x1xf32>
    %c0_17 = arith.constant 0 : index
    %c0_18 = arith.constant 0 : index
    %23 = vector.load %arg5[%c0_17, %c0_18] : memref<16x1xf32, #tpu.memory_space<vmem>>, vector<16x1xf32>
    tpu.vector_store %arg5[%c0_17, %c0_18], %22 {strides = array<i32>} : memref<16x1xf32, #tpu.memory_space<vmem>>, vector<16x1xf32>,
    return
  }
  func.func @transform_0(%arg0: i32) -> (i32, i32, i32) {
    %c0_i32 = arith.constant 0 : i32
    %c0_i32_0 = arith.constant 0 : i32
    %c0_i32_1 = arith.constant 0 : i32
    return %arg0, %c0_i32, %c0_i32_0 : i32, i32, i32
  }
  func.func @transform_1(%arg0: i32) -> (i32, i32) {
    %c0_i32 = arith.constant 0 : i32
    %c0_i32_0 = arith.constant 0 : i32
    %c0_i32_1 = arith.constant 0 : i32
    return %c0_i32, %c0_i32_0 : i32, i32
  }
  func.func @transform_2(%arg0: i32) -> (i32, i32, i32) {
    %c0_i32 = arith.constant 0 : i32
    %c0_i32_0 = arith.constant 0 : i32
    %c0_i32_1 = arith.constant 0 : i32
    return %arg0, %c0_i32, %c0_i32_0 : i32, i32, i32
  }
  func.func @transform_3(%arg0: i32) -> (i32, i32) {
    %c0_i32 = arith.constant 0 : i32
    %c0_i32_0 = arith.constant 0 : i32
    %c0_i32_1 = arith.constant 0 : i32
    return %c0_i32, %c0_i32_0 : i32, i32
  }
  func.func @transform_4(%arg0: i32) -> (i32, i32) {
    %c0_i32 = arith.constant 0 : i32
    %c0_i32_0 = arith.constant 0 : i32
    %c0_i32_1 = arith.constant 0 : i32
    return %c0_i32, %c0_i32_0 : i32, i32
  }
}

module attributes {stable_mosaic.version = 11 : i64} {
  func.func @head_kernel(%arg0: i32, %arg1: memref<1x16x256xbf16, #tpu.memory_space<vmem>>, %arg2: memref<8x16xbf16, #tpu.memory_space<vmem>>, %arg3: memref<8x1xf32, #tpu.memory_space<vmem>>, %arg4: memref<256x1024xbf16, #tpu.memory_space<vmem>>, %arg5: memref<1x8x1024xf32, #tpu.memory_space<vmem>>) attributes {dimension_semantics = [#tpu.dimension_semantics<parallel>], iteration_bounds = array<i64: 2>, scalar_prefetch = 0 : i64, scratch_operands = 0 : i64, tpu.core_type = #tpu.core_type<tc>, window_params = [{transform_indices = @transform_0, window_bounds = array<i64: 1, 16, 256>}, {pipeline_mode = #tpu.pipeline_mode<synchronous>, transform_indices = @transform_1, window_bounds = array<i64: 8, 16>}, {pipeline_mode = #tpu.pipeline_mode<synchronous>, transform_indices = @transform_2, window_bounds = array<i64: 8, 1>}, {pipeline_mode = #tpu.pipeline_mode<synchronous>, transform_indices = @transform_3, window_bounds = array<i64: 256, 1024>}, {transform_indices = @transform_4, window_bounds = array<i64: 1, 8, 1024>}]} {
    %c0 = arith.constant 0 : index
    %c0_0 = arith.constant 0 : index
    %0 = vector.load %arg2[%c0, %c0_0] : memref<8x16xbf16, #tpu.memory_space<vmem>>, vector<8x16xbf16>
    %c0_1 = arith.constant 0 : index
    %c0_2 = arith.constant 0 : index
    %c0_3 = arith.constant 0 : index
    %1 = vector.load %arg1[%c0_1, %c0_2, %c0_3] : memref<1x16x256xbf16, #tpu.memory_space<vmem>>, vector<1x16x256xbf16>
    %2 = vector.shape_cast %1 : vector<1x16x256xbf16> to vector<16x256xbf16>
    %cst = arith.constant dense<0.000000e+00> : vector<8x256xf32>
    %3 = tpu.matmul %0, %2, %cst {dimension_numbers = #tpu.dot_dimension_numbers<[1], [0], [0], [1], [0, 0, 1, 1], [], []>} : vector<8x16xbf16>, vector<16x256xbf16>, vector<8x256xf32> -> vector<8x256xf32>
    %c0_4 = arith.constant 0 : index
    %c0_5 = arith.constant 0 : index
    %4 = vector.load %arg3[%c0_4, %c0_5] : memref<8x1xf32, #tpu.memory_space<vmem>>, vector<8x1xf32>
    %5 = vector.broadcast %4 : vector<8x1xf32> to vector<8x256xf32>
    %6 = arith.addf %3, %5 : vector<8x256xf32>
    %7 = arith.truncf %6 : vector<8x256xf32> to vector<8x256xbf16>
    %c0_6 = arith.constant 0 : index
    %c0_7 = arith.constant 0 : index
    %8 = vector.load %arg4[%c0_6, %c0_7] : memref<256x1024xbf16, #tpu.memory_space<vmem>>, vector<256x1024xbf16>
    %cst_8 = arith.constant dense<0.000000e+00> : vector<8x1024xf32>
    %9 = tpu.matmul %7, %8, %cst_8 {dimension_numbers = #tpu.dot_dimension_numbers<[1], [0], [0], [1], [0, 0, 1, 1], [], []>} : vector<8x256xbf16>, vector<256x1024xbf16>, vector<8x1024xf32> -> vector<8x1024xf32>
    %c0_9 = arith.constant 0 : index
    %c0_10 = arith.constant 0 : index
    %c0_11 = arith.constant 0 : index
    %10 = vector.load %arg5[%c0_9, %c0_10, %c0_11] : memref<1x8x1024xf32, #tpu.memory_space<vmem>>, vector<1x8x1024xf32>
    %11 = vector.shape_cast %10 : vector<1x8x1024xf32> to vector<8x1024xf32>
    %12 = vector.shape_cast %9 : vector<8x1024xf32> to vector<1x8x1024xf32>
    tpu.vector_store %arg5[%c0_9, %c0_10, %c0_11], %12 {strides = array<i32>} : memref<1x8x1024xf32, #tpu.memory_space<vmem>>, vector<1x8x1024xf32>,
    return
  }
  func.func @transform_0(%arg0: i32) -> (i32, i32, i32) {
    %c0_i32 = arith.constant 0 : i32
    %c0_i32_0 = arith.constant 0 : i32
    %c0_i32_1 = arith.constant 0 : i32
    return %arg0, %c0_i32, %c0_i32_0 : i32, i32, i32
  }
  func.func @transform_1(%arg0: i32) -> (i32, i32) {
    %c0_i32 = arith.constant 0 : i32
    %c0_i32_0 = arith.constant 0 : i32
    %c0_i32_1 = arith.constant 0 : i32
    return %c0_i32, %c0_i32_0 : i32, i32
  }
  func.func @transform_2(%arg0: i32) -> (i32, i32) {
    %c0_i32 = arith.constant 0 : i32
    %c0_i32_0 = arith.constant 0 : i32
    %c0_i32_1 = arith.constant 0 : i32
    return %c0_i32, %c0_i32_0 : i32, i32
  }
  func.func @transform_3(%arg0: i32) -> (i32, i32) {
    %c0_i32 = arith.constant 0 : i32
    %c0_i32_0 = arith.constant 0 : i32
    %c0_i32_1 = arith.constant 0 : i32
    return %c0_i32, %c0_i32_0 : i32, i32
  }
  func.func @transform_4(%arg0: i32) -> (i32, i32, i32) {
    %c0_i32 = arith.constant 0 : i32
    %c0_i32_0 = arith.constant 0 : i32
    %c0_i32_1 = arith.constant 0 : i32
    return %arg0, %c0_i32, %c0_i32_0 : i32, i32, i32
  }
}

</mosaic_0001>

<llo_original>
// kernel: network_forward.2
$region0: #{network_forward.2}
  #allocation0 [shape = 'u32[]', space=smem, size = 0x4, offset = 0x4, fixed_abs, tag = 'smem constant byte address 0x4 - core index']
  #allocation1 [shape = 'u32[144,128]{1,0:T(1,128)}', space=vmem, size = 0x12000, scoped, tag = 'internal scratch']
  %s0 = inlined_call_operand.vmem [shape: bf16[2,27,256], index: 0, kind: input, shape index: {}]
  %s1 = inlined_call_operand.vmem [shape: bf16[16,27], index: 1, kind: input, shape index: {}]
  %s2 = inlined_call_operand.vmem [shape: bf16[2,16,256], index: 2, kind: output, shape index: {0}]
  %s3 = inlined_call_operand.vmem [shape: f32[16,1], index: 3, kind: output, shape index: {1}]
  %s4 = inlined_call_operand.vmem [shape: f32[16,1], index: 4, kind: output, shape index: {2}]
  %5 = xla_tuple %s2, %s3, %s4
  %s6 = sld [smem:[#allocation0]]
  $region61: #{network_forward.2} parent=0
    _
  %s8 = ssub.s32 1, %s6
  %s9 = scalar_select 0, %s8, %s6
  loop: start=0, step=1, limit=4
  $region2: #{network_forward.2} parent=0 // loop_pre_header
    _
  $region3: #{network_forward.2} parent=0 // loop_header
    %s11 = sphi 0, %s15
    %p12 = scmp.ge.s32.totalorder %s11, 4
    %s21 = sphi 0, %s23
    %s24 = sphi 0, %s21
    %s25 = sphi 0, %s24
    %s41 = sphi 0, %s25
    %s45 = sphi 0, %s45
    %s47 = sphi 0, %s45
    %s48 = sphi 0, %s47
    %s62 = sphi 0, %s48
    %s68 = sphi 0, %s70
    %s71 = sphi 0, %s68
    %s72 = sphi 0, %s71
    %s88 = sphi 0, %s72
    %s92 = sphi 0, %s92
    %s94 = sphi 0, %s92
    %s95 = sphi 0, %s94
    %s109 = sphi 0, %s95
    %s113 = sphi 0, %s113
    %s115 = sphi 0, %s113
    %s116 = sphi 0, %s115
    %s130 = sphi 0, %s116
  $region4: #{network_forward.2} parent=0 // loop_header_branch
    %14 = sbr.rel (%p12) target = $region8
  $region5: #{network_forward.2} parent=0 // loop_body
    %s16 = ssub.s32 %s11, 1
    %s17 = ssub.s32 %s11, 2
    %s18 = sadd.s32 %s11, 1
    %s19 = ssub.s32 %s11, %s18
    %p20 = scmp.eq.s32.totalorder %s19, 0
    %s22 = sadd.s32 %s21, 1
    %s23 = scalar_select %p20, %s21, %s22
    %p26 = pneg %p20
    %p27 = scmp.eq.s32.totalorder %s11, 1
    %p28 = por %p26, %p27
    %p29 = scmp.ne.s32.totalorder %s21, %s24
    %p30 = scmp.eq.s32.totalorder %s11, 0
    %p31 = por %p29, %p30
    %p32 = scmp.ne.s32.totalorder %s21, %s24
    %p33 = scmp.eq.s32.totalorder %s16, 1
    %p34 = por %p32, %p33
    %p35 = scmp.ne.s32.totalorder %s24, %s25
    %p36 = scmp.eq.s32.totalorder %s16, 0
    %p37 = por %p35, %p36
    %p38 = scmp.ne.s32.totalorder %s24, %s25
    %p39 = scmp.eq.s32.totalorder %s17, 1
    %p40 = por %p38, %p39
    %p42 = scmp.ne.s32.totalorder %s25, %s41
    %p43 = scmp.eq.s32.totalorder %s17, 0
    %p44 = por %p42, %p43
    %s46 = sadd.s32 %s45, 1
    %p49 = scmp.eq.s32.totalorder %s11, 1
    %p50 = scmp.ne.s32.totalorder %s45, %s47
    %p51 = scmp.eq.s32.totalorder %s11, 0
    %p52 = por %p50, %p51
    %p53 = scmp.ne.s32.totalorder %s45, %s47
    %p54 = scmp.eq.s32.totalorder %s16, 1
    %p55 = por %p53, %p54
    %p56 = scmp.ne.s32.totalorder %s47, %s48
    %p57 = scmp.eq.s32.totalorder %s16, 0
    %p58 = por %p56, %p57
    %p59 = scmp.ne.s32.totalorder %s47, %s48
    %p60 = scmp.eq.s32.totalorder %s17, 1
    %p61 = por %p59, %p60
    %p63 = scmp.ne.s32.totalorder %s48, %s62
    %p64 = scmp.eq.s32.totalorder %s17, 0
    %p65 = por %p63, %p64
    %s66 = ssub.s32 %s11, %s18
    %p67 = scmp.eq.s32.totalorder %s66, 0
    %s69 = sadd.s32 %s68, 1
    %s70 = scalar_select %p67, %s68, %s69
    %p73 = pneg %p67
    %p74 = scmp.eq.s32.totalorder %s11, 1
    %p75 = por %p73, %p74
    %p76 = scmp.ne.s32.totalorder %s68, %s71
    %p77 = scmp.eq.s32.totalorder %s11, 0
    %p78 = por %p76, %p77
    %p79 = scmp.ne.s32.totalorder %s68, %s71
    %p80 = scmp.eq.s32.totalorder %s16, 1
    %p81 = por %p79, %p80
    %p82 = scmp.ne.s32.totalorder %s71, %s72
    %p83 = scmp.eq.s32.totalorder %s16, 0
    %p84 = por %p82, %p83
    %p85 = scmp.ne.s32.totalorder %s71, %s72
    %p86 = scmp.eq.s32.totalorder %s17, 1
    %p87 = por %p85, %p86
    %p89 = scmp.ne.s32.totalorder %s72, %s88
    %p90 = scmp.eq.s32.totalorder %s17, 0
    %p91 = por %p89, %p90
    %s93 = sadd.s32 %s92, 1
    %p96 = scmp.eq.s32.totalorder %s11, 1
    %p97 = scmp.ne.s32.totalorder %s92, %s94
    %p98 = scmp.eq.s32.totalorder %s11, 0
    %p99 = por %p97, %p98
    %p100 = scmp.ne.s32.totalorder %s92, %s94
    %p101 = scmp.eq.s32.totalorder %s16, 1
    %p102 = por %p100, %p101
    %p103 = scmp.ne.s32.totalorder %s94, %s95
    %p104 = scmp.eq.s32.totalorder %s16, 0
    %p105 = por %p103, %p104
    %p106 = scmp.ne.s32.totalorder %s94, %s95
    %p107 = scmp.eq.s32.totalorder %s17, 1
    %p108 = por %p106, %p107
    %p110 = scmp.ne.s32.totalorder %s95, %s109
    %p111 = scmp.eq.s32.totalorder %s17, 0
    %p112 = por %p110, %p111
    %s114 = sadd.s32 %s113, 1
    %p117 = scmp.eq.s32.totalorder %s11, 1
    %p118 = scmp.ne.s32.totalorder %s113, %s115
    %p119 = scmp.eq.s32.totalorder %s11, 0
    %p120 = por %p118, %p119
    %p121 = scmp.ne.s32.totalorder %s113, %s115
    %p122 = scmp.eq.s32.totalorder %s16, 1
    %p123 = por %p121, %p122
    %p124 = scmp.ne.s32.totalorder %s115, %s116
    %p125 = scmp.eq.s32.totalorder %s16, 0
    %p126 = por %p124, %p125
    %p127 = scmp.ne.s32.totalorder %s115, %s116
    %p128 = scmp.eq.s32.totalorder %s17, 1
    %p129 = por %p127, %p128
    %p131 = scmp.ne.s32.totalorder %s116, %s130
    %p132 = scmp.eq.s32.totalorder %s17, 0
    %p133 = por %p131, %p132
    %p134 = scmp.le.s32.totalorder 1, %s11
    %p135 = scmp.lt.s32.totalorder %s11, 3
    %p136 = pnand %p134, %p135
    %p137 = pneg %p136
    // Predicated region
    $region9: #{network_forward.2} parent=5 // pred_check
      _
    $region10: #{network_forward.2} parent=5 // pred_check_branch
      %139 = sbr.rel (%p136) target = $region12
    $region11: #{network_forward.2} parent=5 // pred_region
      %s140 = ssub.s32 %s11, 1
      // Predicated region
      $region13: #{network_forward.2} parent=11 // pred_check
        %p141 = pneg %p58
      $region14: #{network_forward.2} parent=11 // pred_check_branch
        %143 = sbr.rel (%p141) target = $region16
      $region15: #{network_forward.2} parent=11 // pred_region
        _
      $region16: #{network_forward.2} parent=11 // pred_fallthru
        _
    $region12: #{network_forward.2} parent=5 // pred_fallthru
      _
    %p144 = scmp.lt.s32.totalorder %s11, 2
    // Predicated region
    $region17: #{network_forward.2} parent=5 // pred_check
      %p145 = pneg %p144
    $region18: #{network_forward.2} parent=5 // pred_check_branch
      %147 = sbr.rel (%p145) target = $region20
    $region19: #{network_forward.2} parent=5 // pred_region
      // Predicated region
      $region21: #{network_forward.2} parent=19 // pred_check
        %p148 = pneg %p31
      $region22: #{network_forward.2} parent=19 // pred_check_branch
        %150 = sbr.rel (%p148) target = $region24
      $region23: #{network_forward.2} parent=19 // pred_region
        %p151 = scmp.lt.s32.totalorder %s11, 1
        %s152 = scalar_select %p151, %s11, 1
        %s153 = smul.addr %s152, 8
        %s154 = smul.addr %s153, 4
        %s155 = scalar_lea.vmem %s0, %s154
      $region24: #{network_forward.2} parent=19 // pred_fallthru
        _
    $region20: #{network_forward.2} parent=5 // pred_fallthru
      _
    %p156 = scmp.le.s32.totalorder 1, %s11
    %p157 = scmp.lt.s32.totalorder %s11, 3
    %p158 = pnand %p156, %p157
    %p159 = pneg %p158
    // Predicated region
    $region25: #{network_forward.2} parent=5 // pred_check
      _
    $region26: #{network_forward.2} parent=5 // pred_check_branch
      %161 = sbr.rel (%p158) target = $region28
    $region27: #{network_forward.2} parent=5 // pred_region
      %s162 = ssub.s32 %s11, 1
      %p163 = scmp.lt.s32.totalorder %s16, 1
      %s164 = scalar_select %p163, %s16, 1
      %s165 = smul.addr %s164, 8
      %s166 = smul.addr %s165, 4
      %s167 = scalar_lea.vmem %s0, %s166
      %p168 = pneg %p37
      %p169 = pneg %p34
      %p170 = pneg %p58
      %p171 = pneg %p55
      %p172 = pneg %p84
      %p173 = pneg %p81
      %p174 = scmp.lt.s32.totalorder %s16, 1
      %s175 = scalar_select %p174, %s16, 1
      %s176 = smul.addr %s175, 4
      %s177 = smul.addr %s176, 4
      %s178 = scalar_lea.vmem %s2, %s177
      %p179 = pneg %p105
      %p180 = pneg %p102
      %p181 = pneg %p126
      %p182 = pneg %p123
      %p183 = scmp.lt.s32.totalorder %s16, 1
      %s184 = scalar_select %p183, %s16, 1
      %s185 = smul.addr %s184, 8
      %s186 = smul.addr %s185, 4
      %s187 = scalar_lea.vmem %s0, %s186
      %p188 = scmp.lt.s32.totalorder %s16, 1
      %s189 = scalar_select %p188, %s16, 1
      %s190 = smul.addr %s189, 4
      %s191 = smul.addr %s190, 4
      %s192 = scalar_lea.vmem %s2, %s191
      %p194 = scmp.eq.s32.totalorder %s16, 0
      // Predicated region
      $region29: #{network_forward.2} parent=27 // pred_check
        %p195 = pneg %p194
      $region30: #{network_forward.2} parent=27 // pred_check_branch
        %197 = sbr.rel (%p195) target = $region32
      $region31: #{network_forward.2} parent=27 // pred_region
        %vm198 = vcmask 7168
        %199 = vst.msk [vmem:[%s3] sm:$0xff] %vm198, 0.0
        %200 = vst.msk [vmem:[%s3 + $0x8] sm:$0xff] %vm198, 0.0
        %201 = vst.msk [vmem:[%s4] sm:$0xff] %vm198, 0.0
        %202 = vst.msk [vmem:[%s4 + $0x8] sm:$0xff] %vm198, 0.0
      $region32: #{network_forward.2} parent=27 // pred_fallthru
        _
      %v203 = vld [vmem:[%s1] sm:$0xf]
      %v204 = vld [vmem:[%s1 + $0x4] sm:$0xf]
      %v205 = vld [vmem:[%s187] sm:$0xff]
      %v206 = vld [vmem:[%s187 + $0x8] sm:$0xff]
      %v207 = vld [vmem:[%s187 + $0x10] sm:$0xff]
      %v208 = vld [vmem:[%s187 + $0x18] sm:$0x33]
      %v211 = vunpack.c.l.b16 %v203
      %v212 = vunpack.c.l.b16 %v204
      %v213 = vpack.c.b16 %v212, %v211
      %v218 = vunpack.c.l.b16 %v205
      %v219 = vunpack.c.h.b16 %v205
      %v220 = vunpack.c.l.b16 %v206
      %v221 = vunpack.c.h.b16 %v206
      %v222 = vunpack.c.l.b16 %v207
      %v223 = vunpack.c.h.b16 %v207
      %v224 = vunpack.c.l.b16 %v208
      %v225 = vunpack.c.h.b16 %v208
      %v226 = vpack.c.b16 %v220, %v218
      %v227 = vpack.c.b16 %v221, %v219
      %v228 = vpack.c.b16 %v224, %v222
      %v229 = vpack.c.b16 %v225, %v223
      %vm232 = vcmask 220160
      %v234 = vsel %vm232, %v213, 0
      %vm236 = vcmask 1044480
      %vm237 = vcmask 1045504
      %v238 = vsel %vm236, 4294967295, 65535
      %v239 = vsel %vm237, %v238, 0
      %v241 = vand.u32 %v228, %v239
      %v244 = vand.u32 %v229, %v239
      %246 = vmatprep.subr.bf16.mxu0 0
      %247 = vmatpush1.bf16.msra.mxu0 0
      %248 = vmatprep.subr.bf16.mxu0 0
      %249 = vmatpush1.bf16.msra.mxu0 0
      %250 = vmatprep.subr.bf16.mxu0 0
      %251 = vmatpush1.bf16.msra.mxu0 0
      %252 = vmatprep.subr.bf16.mxu0 0
      %253 = vmatpush1.bf16.msra.mxu0 0
      %254 = vmatprep.subr.bf16.mxu0 0
      %255 = vmatpush1.bf16.msra.mxu0 0
      %256 = vmatprep.subr.bf16.mxu0 0
      %257 = vmatpush1.bf16.msra.mxu0 0
      %258 = vmatprep.subr.bf16.mxu0 %v244
      %259 = vmatpush1.bf16.msra.mxu0 %v241
      %260 = vmatprep.subr.bf16.mxu0 %v227
      %261 = vmatpush1.bf16.msra.mxu0 %v226
      %262 = vmatprep.subr.bf16.mxu0 0
      %263 = vmatpush2.bf16.msra.mxu0 0
      %264 = vmatprep.subr.bf16.mxu0 0
      %265 = vmatpush2.bf16.msra.mxu0 0
      %266 = vmatprep.subr.bf16.mxu0 0
      %267 = vmatpush2.bf16.msra.mxu0 0
      %268 = vmatprep.subr.bf16.mxu0 0
      %269 = vmatpush2.bf16.msra.mxu0 0
      %270 = vmatprep.subr.bf16.mxu0 0
      %271 = vmatpush2.bf16.msra.mxu0 0
      %272 = vmatprep.subr.bf16.mxu0 0
      %273 = vmatpush2.bf16.msra.mxu0 0
      %274 = vmatprep.subr.bf16.mxu0 0
      %275 = vmatpush2.bf16.msra.mxu0 0
      %276 = vmatprep.subr.bf16.mxu0 0
      %277 = vmatpush2.bf16.msra.mxu0 0
      %278 = vmatprep.mubr.bf16.mxu0 0
      %279 = vmatmul.mubr.bf16.gmra.mxu0 %v234
      %v280 = vpop.f32.mrf.mxu0
      %v281 = vadd.f32 0.0, %v280
      %v282 = vpop.f32.mrf.mxu0
      %v283 = vadd.f32 0.0, %v282
      %v284 = vpop.f32.mrf.mxu0
      %v285 = vadd.f32 0.0, %v284
      %v286 = vpop.f32.mrf.mxu0
      %v287 = vadd.f32 0.0, %v286
      %288 = vdwg.mxu0
      %v289 = vmax.f32 %v281, 0.0
      %v290 = vmax.f32 %v283, 0.0
      %v291 = vmax.f32 %v285, 0.0
      %v292 = vmax.f32 %v287, 0.0
      %v293 = vpack.c.bf16 %v291, %v289
      %v294 = vpack.c.bf16 %v292, %v290
      %v297 = vunpack.c.l.b16 %v293
      %v298 = vunpack.c.l.b16 %v294
      %v299 = vunpack.c.h.b16 %v293
      %v300 = vunpack.c.h.b16 %v294
      %v301 = vpack.c.b16 %v298, %v297
      %v302 = vpack.c.b16 %v300, %v299
      %305 = vst [vmem:[%s192] sm:$0xff] %v301
      %306 = vst [vmem:[%s192 + $0x8] sm:$0xff] %v302
      %v307 = vld [vmem:[%s3] sm:$0xff]
      %v308 = vld [vmem:[%s3 + $0x8] sm:$0xff]
      %v309 = vadd.f32 %v289, %v290
      %310 = vadd.xlane.f32.xlu0 %v309
      %v311 = vpop.xlane.xlu0 %310
      %v312 = vadd.f32 %v291, %v292
      %313 = vadd.xlane.f32.xlu0 %v312
      %v314 = vpop.xlane.xlu0 %313
      %v315 = vadd.f32 %v307, %v311
      %v316 = vadd.f32 %v308, %v314
      %vm317 = vcmask 7168
      %318 = vst.msk [vmem:[%s3] sm:$0xff] %vm317, %v315
      %319 = vst.msk [vmem:[%s3 + $0x8] sm:$0xff] %vm317, %v316
      %v320 = vld [vmem:[%s4] sm:$0xff]
      %v321 = vld [vmem:[%s4 + $0x8] sm:$0xff]
      %v322 = vmul.f32 %v289, %v289
      %v323 = vmul.f32 %v290, %v290
      %v324 = vmul.f32 %v291, %v291
      %v325 = vmul.f32 %v292, %v292
      %v326 = vadd.f32 %v322, %v323
      %327 = vadd.xlane.f32.xlu0 %v326
      %v328 = vpop.xlane.xlu0 %327
      %v329 = vadd.f32 %v324, %v325
      %330 = vadd.xlane.f32.xlu0 %v329
      %v331 = vpop.xlane.xlu0 %330
      %v332 = vadd.f32 %v320, %v328
      %v333 = vadd.f32 %v321, %v331
      %334 = vst.msk [vmem:[%s4] sm:$0xff] %vm317, %v332
      %335 = vst.msk [vmem:[%s4 + $0x8] sm:$0xff] %vm317, %v333
      %p336 = scmp.lt.s32.totalorder %s16, 1
      %s337 = scalar_select %p336, %s16, 1
      %s338 = smul.addr %s337, 4
      %s339 = smul.addr %s338, 4
      %s340 = scalar_lea.vmem %s2, %s339
      // Predicated region
      $region33: #{network_forward.2} parent=27 // pred_check
        %p341 = pneg %p81
      $region34: #{network_forward.2} parent=27 // pred_check_branch
        %343 = sbr.rel (%p341) target = $region36
      $region35: #{network_forward.2} parent=27 // pred_region
        _
      $region36: #{network_forward.2} parent=27 // pred_fallthru
        _
      // Predicated region
      $region37: #{network_forward.2} parent=27 // pred_check
        %p344 = pneg %p102
      $region38: #{network_forward.2} parent=27 // pred_check_branch
        %346 = sbr.rel (%p344) target = $region40
      $region39: #{network_forward.2} parent=27 // pred_region
        _
      $region40: #{network_forward.2} parent=27 // pred_fallthru
        _
      // Predicated region
      $region41: #{network_forward.2} parent=27 // pred_check
        %p347 = pneg %p123
      $region42: #{network_forward.2} parent=27 // pred_check_branch
        %349 = sbr.rel (%p347) target = $region44
      $region43: #{network_forward.2} parent=27 // pred_region
        _
      $region44: #{network_forward.2} parent=27 // pred_fallthru
        _
      // Predicated region
      $region45: #{network_forward.2} parent=27 // pred_check
        %p350 = pneg %p102
      $region46: #{network_forward.2} parent=27 // pred_check_branch
        %352 = sbr.rel (%p350) target = $region48
      $region47: #{network_forward.2} parent=27 // pred_region
        _
      $region48: #{network_forward.2} parent=27 // pred_fallthru
        _
      // Predicated region
      $region49: #{network_forward.2} parent=27 // pred_check
        %p353 = pneg %p123
      $region50: #{network_forward.2} parent=27 // pred_check_branch
        %355 = sbr.rel (%p353) target = $region52
      $region51: #{network_forward.2} parent=27 // pred_region
        _
      $region52: #{network_forward.2} parent=27 // pred_fallthru
        _
    $region28: #{network_forward.2} parent=5 // pred_fallthru
      _
    %p356 = scmp.le.s32.totalorder 2, %s11
    // Predicated region
    $region53: #{network_forward.2} parent=5 // pred_check
      %p357 = pneg %p356
    $region54: #{network_forward.2} parent=5 // pred_check_branch
      %359 = sbr.rel (%p357) target = $region56
    $region55: #{network_forward.2} parent=5 // pred_region
      %s360 = ssub.s32 %s11, 2
      // Predicated region
      $region57: #{network_forward.2} parent=55 // pred_check
        %p361 = pneg %p87
      $region58: #{network_forward.2} parent=55 // pred_check_branch
        %363 = sbr.rel (%p361) target = $region60
      $region59: #{network_forward.2} parent=55 // pred_region
        %p364 = scmp.lt.s32.totalorder %s17, 1
        %s365 = scalar_select %p364, %s17, 1
        %s366 = smul.addr %s365, 4
        %s367 = smul.addr %s366, 4
        %s368 = scalar_lea.vmem %s2, %s367
      $region60: #{network_forward.2} parent=55 // pred_fallthru
        _
    $region56: #{network_forward.2} parent=5 // pred_fallthru
      _
  $region6: #{network_forward.2} parent=0 // loop_footer
    %s15 = sadd.s32 1, %s11
  $region7: #{network_forward.2} parent=0 // loop_footer_branch
    %10 = sbr.rel target = $region3
  $region8: #{network_forward.2} parent=0 // loop_exit
    _

// kernel: network_forward.3
$region0: #{network_forward.3}
  #allocation0 [shape = 'u32[]', space=smem, size = 0x4, offset = 0x4, fixed_abs, tag = 'smem constant byte address 0x4 - core index']
  #allocation1 [shape = 'u32[144,128]{1,0:T(1,128)}', space=vmem, size = 0x12000, scoped, tag = 'internal scratch']
  %s0 = inlined_call_operand.vmem [shape: bf16[2,16,256], index: 0, kind: input, shape index: {}]
  %s1 = inlined_call_operand.vmem [shape: bf16[8,16], index: 1, kind: input, shape index: {}]
  %s2 = inlined_call_operand.vmem [shape: f32[8,1], index: 2, kind: input, shape index: {}]
  %s3 = inlined_call_operand.vmem [shape: bf16[256,1024], index: 3, kind: input, shape index: {}]
  %s4 = inlined_call_operand.vmem [shape: f32[2,8,1024], index: 4, kind: output, shape index: {}]
  %s5 = sld [smem:[#allocation0]]
  $region49: #{network_forward.3} parent=0
    _
  %s7 = ssub.s32 1, %s5
  %s8 = scalar_select 0, %s7, %s5
  loop: start=0, step=1, limit=4
  $region2: #{network_forward.3} parent=0 // loop_pre_header
    _
  $region3: #{network_forward.3} parent=0 // loop_header
    %s10 = sphi 0, %s14
    %p11 = scmp.ge.s32.totalorder %s10, 4
    %s20 = sphi 0, %s22
    %s23 = sphi 0, %s20
    %s24 = sphi 0, %s23
    %s40 = sphi 0, %s24
    %s44 = sphi 0, %s44
    %s46 = sphi 0, %s44
    %s47 = sphi 0, %s46
    %s61 = sphi 0, %s47
    %s65 = sphi 0, %s65
    %s67 = sphi 0, %s65
    %s68 = sphi 0, %s67
    %s82 = sphi 0, %s68
    %s86 = sphi 0, %s86
    %s88 = sphi 0, %s86
    %s89 = sphi 0, %s88
    %s103 = sphi 0, %s89
    %s109 = sphi 0, %s111
    %s112 = sphi 0, %s109
    %s113 = sphi 0, %s112
    %s129 = sphi 0, %s113
  $region4: #{network_forward.3} parent=0 // loop_header_branch
    %13 = sbr.rel (%p11) target = $region8
  $region5: #{network_forward.3} parent=0 // loop_body
    %s15 = ssub.s32 %s10, 1
    %s16 = ssub.s32 %s10, 2
    %s17 = sadd.s32 %s10, 1
    %s18 = ssub.s32 %s10, %s17
    %p19 = scmp.eq.s32.totalorder %s18, 0
    %s21 = sadd.s32 %s20, 1
    %s22 = scalar_select %p19, %s20, %s21
    %p25 = pneg %p19
    %p26 = scmp.eq.s32.totalorder %s10, 1
    %p27 = por %p25, %p26
    %p28 = scmp.ne.s32.totalorder %s20, %s23
    %p29 = scmp.eq.s32.totalorder %s10, 0
    %p30 = por %p28, %p29
    %p31 = scmp.ne.s32.totalorder %s20, %s23
    %p32 = scmp.eq.s32.totalorder %s15, 1
    %p33 = por %p31, %p32
    %p34 = scmp.ne.s32.totalorder %s23, %s24
    %p35 = scmp.eq.s32.totalorder %s15, 0
    %p36 = por %p34, %p35
    %p37 = scmp.ne.s32.totalorder %s23, %s24
    %p38 = scmp.eq.s32.totalorder %s16, 1
    %p39 = por %p37, %p38
    %p41 = scmp.ne.s32.totalorder %s24, %s40
    %p42 = scmp.eq.s32.totalorder %s16, 0
    %p43 = por %p41, %p42
    %s45 = sadd.s32 %s44, 1
    %p48 = scmp.eq.s32.totalorder %s10, 1
    %p49 = scmp.ne.s32.totalorder %s44, %s46
    %p50 = scmp.eq.s32.totalorder %s10, 0
    %p51 = por %p49, %p50
    %p52 = scmp.ne.s32.totalorder %s44, %s46
    %p53 = scmp.eq.s32.totalorder %s15, 1
    %p54 = por %p52, %p53
    %p55 = scmp.ne.s32.totalorder %s46, %s47
    %p56 = scmp.eq.s32.totalorder %s15, 0
    %p57 = por %p55, %p56
    %p58 = scmp.ne.s32.totalorder %s46, %s47
    %p59 = scmp.eq.s32.totalorder %s16, 1
    %p60 = por %p58, %p59
    %p62 = scmp.ne.s32.totalorder %s47, %s61
    %p63 = scmp.eq.s32.totalorder %s16, 0
    %p64 = por %p62, %p63
    %s66 = sadd.s32 %s65, 1
    %p69 = scmp.eq.s32.totalorder %s10, 1
    %p70 = scmp.ne.s32.totalorder %s65, %s67
    %p71 = scmp.eq.s32.totalorder %s10, 0
    %p72 = por %p70, %p71
    %p73 = scmp.ne.s32.totalorder %s65, %s67
    %p74 = scmp.eq.s32.totalorder %s15, 1
    %p75 = por %p73, %p74
    %p76 = scmp.ne.s32.totalorder %s67, %s68
    %p77 = scmp.eq.s32.totalorder %s15, 0
    %p78 = por %p76, %p77
    %p79 = scmp.ne.s32.totalorder %s67, %s68
    %p80 = scmp.eq.s32.totalorder %s16, 1
    %p81 = por %p79, %p80
    %p83 = scmp.ne.s32.totalorder %s68, %s82
    %p84 = scmp.eq.s32.totalorder %s16, 0
    %p85 = por %p83, %p84
    %s87 = sadd.s32 %s86, 1
    %p90 = scmp.eq.s32.totalorder %s10, 1
    %p91 = scmp.ne.s32.totalorder %s86, %s88
    %p92 = scmp.eq.s32.totalorder %s10, 0
    %p93 = por %p91, %p92
    %p94 = scmp.ne.s32.totalorder %s86, %s88
    %p95 = scmp.eq.s32.totalorder %s15, 1
    %p96 = por %p94, %p95
    %p97 = scmp.ne.s32.totalorder %s88, %s89
    %p98 = scmp.eq.s32.totalorder %s15, 0
    %p99 = por %p97, %p98
    %p100 = scmp.ne.s32.totalorder %s88, %s89
    %p101 = scmp.eq.s32.totalorder %s16, 1
    %p102 = por %p100, %p101
    %p104 = scmp.ne.s32.totalorder %s89, %s103
    %p105 = scmp.eq.s32.totalorder %s16, 0
    %p106 = por %p104, %p105
    %s107 = ssub.s32 %s10, %s17
    %p108 = scmp.eq.s32.totalorder %s107, 0
    %s110 = sadd.s32 %s109, 1
    %s111 = scalar_select %p108, %s109, %s110
    %p114 = pneg %p108
    %p115 = scmp.eq.s32.totalorder %s10, 1
    %p116 = por %p114, %p115
    %p117 = scmp.ne.s32.totalorder %s109, %s112
    %p118 = scmp.eq.s32.totalorder %s10, 0
    %p119 = por %p117, %p118
    %p120 = scmp.ne.s32.totalorder %s109, %s112
    %p121 = scmp.eq.s32.totalorder %s15, 1
    %p122 = por %p120, %p121
    %p123 = scmp.ne.s32.totalorder %s112, %s113
    %p124 = scmp.eq.s32.totalorder %s15, 0
    %p125 = por %p123, %p124
    %p126 = scmp.ne.s32.totalorder %s112, %s113
    %p127 = scmp.eq.s32.totalorder %s16, 1
    %p128 = por %p126, %p127
    %p130 = scmp.ne.s32.totalorder %s113, %s129
    %p131 = scmp.eq.s32.totalorder %s16, 0
    %p132 = por %p130, %p131
    %p133 = scmp.le.s32.totalorder 1, %s10
    %p134 = scmp.lt.s32.totalorder %s10, 3
    %p135 = pnand %p133, %p134
    %p136 = pneg %p135
    // Predicated region
    $region9: #{network_forward.3} parent=5 // pred_check
      _
    $region10: #{network_forward.3} parent=5 // pred_check_branch
      %138 = sbr.rel (%p135) target = $region12
    $region11: #{network_forward.3} parent=5 // pred_region
      %s139 = ssub.s32 %s10, 1
      // Predicated region
      $region13: #{network_forward.3} parent=11 // pred_check
        %p140 = pneg %p57
      $region14: #{network_forward.3} parent=11 // pred_check_branch
        %142 = sbr.rel (%p140) target = $region16
      $region15: #{network_forward.3} parent=11 // pred_region
        _
      $region16: #{network_forward.3} parent=11 // pred_fallthru
        _
      // Predicated region
      $region17: #{network_forward.3} parent=11 // pred_check
        %p143 = pneg %p78
      $region18: #{network_forward.3} parent=11 // pred_check_branch
        %145 = sbr.rel (%p143) target = $region20
      $region19: #{network_forward.3} parent=11 // pred_region
        _
      $region20: #{network_forward.3} parent=11 // pred_fallthru
        _
      // Predicated region
      $region21: #{network_forward.3} parent=11 // pred_check
        %p146 = pneg %p99
      $region22: #{network_forward.3} parent=11 // pred_check_branch
        %148 = sbr.rel (%p146) target = $region24
      $region23: #{network_forward.3} parent=11 // pred_region
        _
      $region24: #{network_forward.3} parent=11 // pred_fallthru
        _
    $region12: #{network_forward.3} parent=5 // pred_fallthru
      _
    %p149 = scmp.lt.s32.totalorder %s10, 2
    // Predicated region
    $region25: #{network_forward.3} parent=5 // pred_check
      %p150 = pneg %p149
    $region26: #{network_forward.3} parent=5 // pred_check_branch
      %152 = sbr.rel (%p150) target = $region28
    $region27: #{network_forward.3} parent=5 // pred_region
      // Predicated region
      $region29: #{network_forward.3} parent=27 // pred_check
        %p153 = pneg %p30
      $region30: #{network_forward.3} parent=27 // pred_check_branch
        %155 = sbr.rel (%p153) target = $region32
      $region31: #{network_forward.3} parent=27 // pred_region
        %p156 = scmp.lt.s32.totalorder %s10, 1
        %s157 = scalar_select %p156, %s10, 1
        %s158 = smul.addr %s157, 4
        %s159 = smul.addr %s158, 4
        %s160 = scalar_lea.vmem %s0, %s159
      $region32: #{network_forward.3} parent=27 // pred_fallthru
        _
    $region28: #{network_forward.3} parent=5 // pred_fallthru
      _
    %p161 = scmp.le.s32.totalorder 1, %s10
    %p162 = scmp.lt.s32.totalorder %s10, 3
    %p163 = pnand %p161, %p162
    %p164 = pneg %p163
    // Predicated region
    $region33: #{network_forward.3} parent=5 // pred_check
      _
    $region34: #{network_forward.3} parent=5 // pred_check_branch
      %166 = sbr.rel (%p163) target = $region36
    $region35: #{network_forward.3} parent=5 // pred_region
      %s167 = ssub.s32 %s10, 1
      %p168 = scmp.lt.s32.totalorder %s15, 1
      %s169 = scalar_select %p168, %s15, 1
      %s170 = smul.addr %s169, 4
      %s171 = smul.addr %s170, 4
      %s172 = scalar_lea.vmem %s0, %s171
      %p173 = pneg %p36
      %p174 = pneg %p33
      %p175 = pneg %p57
      %p176 = pneg %p54
      %p177 = pneg %p78
      %p178 = pneg %p75
      %p179 = pneg %p99
      %p180 = pneg %p96
      %p181 = pneg %p125
      %p182 = pneg %p122
      %p183 = scmp.lt.s32.totalorder %s15, 1
      %s184 = scalar_select %p183, %s15, 1
      %s185 = smul.addr %s184, 8
      %s186 = smul.addr %s185, 8
      %s187 = scalar_lea.vmem %s4, %s186
      %p188 = scmp.lt.s32.totalorder %s15, 1
      %s189 = scalar_select %p188, %s15, 1
      %s190 = smul.addr %s189, 4
      %s191 = smul.addr %s190, 4
      %s192 = scalar_lea.vmem %s0, %s191
      %p193 = scmp.lt.s32.totalorder %s15, 1
      %s194 = scalar_select %p193, %s15, 1
      %s195 = smul.addr %s194, 8
      %s196 = smul.addr %s195, 8
      %s197 = scalar_lea.vmem %s4, %s196
      %v199 = vld [vmem:[%s1] sm:$0xf]
      %v200 = vld [vmem:[%s192] sm:$0xff]
      %v201 = vld [vmem:[%s192 + $0x8] sm:$0xff]
      %v202 = vld [vmem:[%s2] sm:$0xff]
      %204 = vset.pattern.permute.xlu0 0
      %205 = vperm.xlu0 %204, %v202
      %v206 = vpop.permute.xlu0 %205
      %v210 = vunpack.c.l.b16 %v200
      %v211 = vunpack.c.h.b16 %v200
      %v212 = vunpack.c.l.b16 %v201
      %v213 = vunpack.c.h.b16 %v201
      %v214 = vpack.c.b16 %v212, %v210
      %v215 = vpack.c.b16 %v213, %v211
      %vm218 = vcmask 130048
      %v220 = vsel %vm218, %v199, 0
      %222 = vmatprep.subr.bf16.mxu0 0
      %223 = vmatpush1.bf16.msra.mxu0 0
      %224 = vmatprep.subr.bf16.mxu0 0
      %225 = vmatpush1.bf16.msra.mxu0 0
      %226 = vmatprep.subr.bf16.mxu0 0
      %227 = vmatpush1.bf16.msra.mxu0 0
      %228 = vmatprep.subr.bf16.mxu0 0
      %229 = vmatpush1.bf16.msra.mxu0 0
      %230 = vmatprep.subr.bf16.mxu0 0
      %231 = vmatpush1.bf16.msra.mxu0 0
      %232 = vmatprep.subr.bf16.mxu0 0
      %233 = vmatpush1.bf16.msra.mxu0 0
      %234 = vmatprep.subr.bf16.mxu0 0
      %235 = vmatpush1.bf16.msra.mxu0 0
      %236 = vmatprep.subr.bf16.mxu0 %v215
      %237 = vmatpush1.bf16.msra.mxu0 %v214
      %238 = vmatprep.subr.bf16.mxu0 0
      %239 = vmatpush2.bf16.msra.mxu0 0
      %240 = vmatprep.subr.bf16.mxu0 0
      %241 = vmatpush2.bf16.msra.mxu0 0
      %242 = vmatprep.subr.bf16.mxu0 0
      %243 = vmatpush2.bf16.msra.mxu0 0
      %244 = vmatprep.subr.bf16.mxu0 0
      %245 = vmatpush2.bf16.msra.mxu0 0
      %246 = vmatprep.subr.bf16.mxu0 0
      %247 = vmatpush2.bf16.msra.mxu0 0
      %248 = vmatprep.subr.bf16.mxu0 0
      %249 = vmatpush2.bf16.msra.mxu0 0
      %250 = vmatprep.subr.bf16.mxu0 0
      %251 = vmatpush2.bf16.msra.mxu0 0
      %252 = vmatprep.subr.bf16.mxu0 0
      %253 = vmatpush2.bf16.msra.mxu0 0
      %254 = vmatprep.mubr.bf16.mxu0 0
      %255 = vmatmul.mubr.bf16.gmra.mxu0 %v220
      %v256 = vpop.f32.mrf.mxu0
      %v257 = vadd.f32 %v206, %v256
      %v258 = vpop.f32.mrf.mxu0
      %v259 = vadd.f32 %v206, %v258
      %v260 = vpop.f32.mrf.mxu0
      %v261 = vpop.f32.mrf.mxu0
      %262 = vdwg.mxu0
      %v263 = vpack.c.bf16 %v257, %v257
      %v264 = vpack.c.bf16 %v259, %v259
      %v265 = vld [vmem:[%s3] sm:$0xff]
      %v266 = vld [vmem:[%s3 + $0x8] sm:$0xff]
      %v267 = vld [vmem:[%s3 + $0x10] sm:$0xff]
      %v268 = vld [vmem:[%s3 + $0x18] sm:$0xff]
      %v269 = vld [vmem:[%s3 + $0x20] sm:$0xff]
      %v270 = vld [vmem:[%s3 + $0x28] sm:$0xff]
      %v271 = vld [vmem:[%s3 + $0x30] sm:$0xff]
      %v272 = vld [vmem:[%s3 + $0x38] sm:$0xff]
      %v273 = vld [vmem:[%s3 + $0x40] sm:$0xff]
      %v274 = vld [vmem:[%s3 + $0x48] sm:$0xff]
      %v275 = vld [vmem:[%s3 + $0x50] sm:$0xff]
      %v276 = vld [vmem:[%s3 + $0x58] sm:$0xff]
      %v277 = vld [vmem:[%s3 + $0x60] sm:$0xff]
      %v278 = vld [vmem:[%s3 + $0x68] sm:$0xff]
      %v279 = vld [vmem:[%s3 + $0x70] sm:$0xff]
      %v280 = vld [vmem:[%s3 + $0x78] sm:$0xff]
      %v281 = vld [vmem:[%s3 + $0x80] sm:$0xff]
      %v282 = vld [vmem:[%s3 + $0x88] sm:$0xff]
      %v283 = vld [vmem:[%s3 + $0x90] sm:$0xff]
      %v284 = vld [vmem:[%s3 + $0x98] sm:$0xff]
      %v285 = vld [vmem:[%s3 + $0xa0] sm:$0xff]
      %v286 = vld [vmem:[%s3 + $0xa8] sm:$0xff]
      %v287 = vld [vmem:[%s3 + $0xb0] sm:$0xff]
      %v288 = vld [vmem:[%s3 + $0xb8] sm:$0xff]
      %v289 = vld [vmem:[%s3 + $0xc0] sm:$0xff]
      %v290 = vld [vmem:[%s3 + $0xc8] sm:$0xff]
      %v291 = vld [vmem:[%s3 + $0xd0] sm:$0xff]
      %v292 = vld [vmem:[%s3 + $0xd8] sm:$0xff]
      %v293 = vld [vmem:[%s3 + $0xe0] sm:$0xff]
      %v294 = vld [vmem:[%s3 + $0xe8] sm:$0xff]
      %v295 = vld [vmem:[%s3 + $0xf0] sm:$0xff]
      %v296 = vld [vmem:[%s3 + $0xf8] sm:$0xff]
      %v297 = vld [vmem:[%s3 + $0x100] sm:$0xff]
      %v298 = vld [vmem:[%s3 + $0x108] sm:$0xff]
      %v299 = vld [vmem:[%s3 + $0x110] sm:$0xff]
      %v300 = vld [vmem:[%s3 + $0x118] sm:$0xff]
      %v301 = vld [vmem:[%s3 + $0x120] sm:$0xff]
      %v302 = vld [vmem:[%s3 + $0x128] sm:$0xff]
      %v303 = vld [vmem:[%s3 + $0x130] sm:$0xff]
      %v304 = vld [vmem:[%s3 + $0x138] sm:$0xff]
      %v305 = vld [vmem:[%s3 + $0x140] sm:$0xff]
      %v306 = vld [vmem:[%s3 + $0x148] sm:$0xff]
      %v307 = vld [vmem:[%s3 + $0x150] sm:$0xff]
      %v308 = vld [vmem:[%s3 + $0x158] sm:$0xff]
      %v309 = vld [vmem:[%s3 + $0x160] sm:$0xff]
      %v310 = vld [vmem:[%s3 + $0x168] sm:$0xff]
      %v311 = vld [vmem:[%s3 + $0x170] sm:$0xff]
      %v312 = vld [vmem:[%s3 + $0x178] sm:$0xff]
      %v313 = vld [vmem:[%s3 + $0x180] sm:$0xff]
      %v314 = vld [vmem:[%s3 + $0x188] sm:$0xff]
      %v315 = vld [vmem:[%s3 + $0x190] sm:$0xff]
      %v316 = vld [vmem:[%s3 + $0x198] sm:$0xff]
      %v317 = vld [vmem:[%s3 + $0x1a0] sm:$0xff]
      %v318 = vld [vmem:[%s3 + $0x1a8] sm:$0xff]
      %v319 = vld [vmem:[%s3 + $0x1b0] sm:$0xff]
      %v320 = vld [vmem:[%s3 + $0x1b8] sm:$0xff]
      %v321 = vld [vmem:[%s3 + $0x1c0] sm:$0xff]
      %v322 = vld [vmem:[%s3 + $0x1c8] sm:$0xff]
      %v323 = vld [vmem:[%s3 + $0x1d0] sm:$0xff]
      %v324 = vld [vmem:[%s3 + $0x1d8] sm:$0xff]
      %v325 = vld [vmem:[%s3 + $0x1e0] sm:$0xff]
      %v326 = vld [vmem:[%s3 + $0x1e8] sm:$0xff]
      %v327 = vld [vmem:[%s3 + $0x1f0] sm:$0xff]
      %v328 = vld [vmem:[%s3 + $0x1f8] sm:$0xff]
      %v329 = vld [vmem:[%s3 + $0x200] sm:$0xff]
      %v330 = vld [vmem:[%s3 + $0x208] sm:$0xff]
      %v331 = vld [vmem:[%s3 + $0x210] sm:$0xff]
      %v332 = vld [vmem:[%s3 + $0x218] sm:$0xff]
      %v333 = vld [vmem:[%s3 + $0x220] sm:$0xff]
      %v334 = vld [vmem:[%s3 + $0x228] sm:$0xff]
      %v335 = vld [vmem:[%s3 + $0x230] sm:$0xff]
      %v336 = vld [vmem:[%s3 + $0x238] sm:$0xff]
      %v337 = vld [vmem:[%s3 + $0x240] sm:$0xff]
      %v338 = vld [vmem:[%s3 + $0x248] sm:$0xff]
      %v339 = vld [vmem:[%s3 + $0x250] sm:$0xff]
      %v340 = vld [vmem:[%s3 + $0x258] sm:$0xff]
      %v341 = vld [vmem:[%s3 + $0x260] sm:$0xff]
      %v342 = vld [vmem:[%s3 + $0x268] sm:$0xff]
      %v343 = vld [vmem:[%s3 + $0x270] sm:$0xff]
      %v344 = vld [vmem:[%s3 + $0x278] sm:$0xff]
      %v345 = vld [vmem:[%s3 + $0x280] sm:$0xff]
      %v346 = vld [vmem:[%s3 + $0x288] sm:$0xff]
      %v347 = vld [vmem:[%s3 + $0x290] sm:$0xff]
      %v348 = vld [vmem:[%s3 + $0x298] sm:$0xff]
      %v349 = vld [vmem:[%s3 + $0x2a0] sm:$0xff]
      %v350 = vld [vmem:[%s3 + $0x2a8] sm:$0xff]
      %v351 = vld [vmem:[%s3 + $0x2b0] sm:$0xff]
      %v352 = vld [vmem:[%s3 + $0x2b8] sm:$0xff]
      %v353 = vld [vmem:[%s3 + $0x2c0] sm:$0xff]
      %v354 = vld [vmem:[%s3 + $0x2c8] sm:$0xff]
      %v355 = vld [vmem:[%s3 + $0x2d0] sm:$0xff]
      %v356 = vld [vmem:[%s3 + $0x2d8] sm:$0xff]
      %v357 = vld [vmem:[%s3 + $0x2e0] sm:$0xff]
      %v358 = vld [vmem:[%s3 + $0x2e8] sm:$0xff]
      %v359 = vld [vmem:[%s3 + $0x2f0] sm:$0xff]
      %v360 = vld [vmem:[%s3 + $0x2f8] sm:$0xff]
      %v361 = vld [vmem:[%s3 + $0x300] sm:$0xff]
      %v362 = vld [vmem:[%s3 + $0x308] sm:$0xff]
      %v363 = vld [vmem:[%s3 + $0x310] sm:$0xff]
      %v364 = vld [vmem:[%s3 + $0x318] sm:$0xff]
      %v365 = vld [vmem:[%s3 + $0x320] sm:$0xff]
      %v366 = vld [vmem:[%s3 + $0x328] sm:$0xff]
      %v367 = vld [vmem:[%s3 + $0x330] sm:$0xff]
      %v368 = vld [vmem:[%s3 + $0x338] sm:$0xff]
      %v369 = vld [vmem:[%s3 + $0x340] sm:$0xff]
      %v370 = vld [vmem:[%s3 + $0x348] sm:$0xff]
      %v371 = vld [vmem:[%s3 + $0x350] sm:$0xff]
      %v372 = vld [vmem:[%s3 + $0x358] sm:$0xff]
      %v373 = vld [vmem:[%s3 + $0x360] sm:$0xff]
      %v374 = vld [vmem:[%s3 + $0x368] sm:$0xff]
      %v375 = vld [vmem:[%s3 + $0x370] sm:$0xff]
      %v376 = vld [vmem:[%s3 + $0x378] sm:$0xff]
      %v377 = vld [vmem:[%s3 + $0x380] sm:$0xff]
      %v378 = vld [vmem:[%s3 + $0x388] sm:$0xff]
      %v379 = vld [vmem:[%s3 + $0x390] sm:$0xff]
      %v380 = vld [vmem:[%s3 + $0x398] sm:$0xff]
      %v381 = vld [vmem:[%s3 + $0x3a0] sm:$0xff]
      %v382 = vld [vmem:[%s3 + $0x3a8] sm:$0xff]
      %v383 = vld [vmem:[%s3 + $0x3b0] sm:$0xff]
      %v384 = vld [vmem:[%s3 + $0x3b8] sm:$0xff]
      %v385 = vld [vmem:[%s3 + $0x3c0] sm:$0xff]
      %v386 = vld [vmem:[%s3 + $0x3c8] sm:$0xff]
      %v387 = vld [vmem:[%s3 + $0x3d0] sm:$0xff]
      %v388 = vld [vmem:[%s3 + $0x3d8] sm:$0xff]
      %v389 = vld [vmem:[%s3 + $0x3e0] sm:$0xff]
      %v390 = vld [vmem:[%s3 + $0x3e8] sm:$0xff]
      %v391 = vld [vmem:[%s3 + $0x3f0] sm:$0xff]
      %v392 = vld [vmem:[%s3 + $0x3f8] sm:$0xff]
      %v521 = vunpack.c.l.b16 %v265
      %v522 = vunpack.c.h.b16 %v265
      %v523 = vunpack.c.l.b16 %v266
      %v524 = vunpack.c.h.b16 %v266
      %v525 = vunpack.c.l.b16 %v267
      %v526 = vunpack.c.h.b16 %v267
      %v527 = vunpack.c.l.b16 %v268
      %v528 = vunpack.c.h.b16 %v268
      %v529 = vunpack.c.l.b16 %v269
      %v530 = vunpack.c.h.b16 %v269
      %v531 = vunpack.c.l.b16 %v270
      %v532 = vunpack.c.h.b16 %v270
      %v533 = vunpack.c.l.b16 %v271
      %v534 = vunpack.c.h.b16 %v271
      %v535 = vunpack.c.l.b16 %v272
      %v536 = vunpack.c.h.b16 %v272
      %v537 = vunpack.c.l.b16 %v273
      %v538 = vunpack.c.h.b16 %v273
      %v539 = vunpack.c.l.b16 %v274
      %v540 = vunpack.c.h.b16 %v274
      %v541 = vunpack.c.l.b16 %v275
      %v542 = vunpack.c.h.b16 %v275
      %v543 = vunpack.c.l.b16 %v276
      %v544 = vunpack.c.h.b16 %v276
      %v545 = vunpack.c.l.b16 %v277
      %v546 = vunpack.c.h.b16 %v277
      %v547 = vunpack.c.l.b16 %v278
      %v548 = vunpack.c.h.b16 %v278
      %v549 = vunpack.c.l.b16 %v279
      %v550 = vunpack.c.h.b16 %v279
      %v551 = vunpack.c.l.b16 %v280
      %v552 = vunpack.c.h.b16 %v280
      %v553 = vunpack.c.l.b16 %v281
      %v554 = vunpack.c.h.b16 %v281
      %v555 = vunpack.c.l.b16 %v282
      %v556 = vunpack.c.h.b16 %v282
      %v557 = vunpack.c.l.b16 %v283
      %v558 = vunpack.c.h.b16 %v283
      %v559 = vunpack.c.l.b16 %v284
      %v560 = vunpack.c.h.b16 %v284
      %v561 = vunpack.c.l.b16 %v285
      %v562 = vunpack.c.h.b16 %v285
      %v563 = vunpack.c.l.b16 %v286
      %v564 = vunpack.c.h.b16 %v286
      %v565 = vunpack.c.l.b16 %v287
      %v566 = vunpack.c.h.b16 %v287
      %v567 = vunpack.c.l.b16 %v288
      %v568 = vunpack.c.h.b16 %v288
      %v569 = vunpack.c.l.b16 %v289
      %v570 = vunpack.c.h.b16 %v289
      %v571 = vunpack.c.l.b16 %v290
      %v572 = vunpack.c.h.b16 %v290
      %v573 = vunpack.c.l.b16 %v291
      %v574 = vunpack.c.h.b16 %v291
      %v575 = vunpack.c.l.b16 %v292
      %v576 = vunpack.c.h.b16 %v292
      %v577 = vunpack.c.l.b16 %v293
      %v578 = vunpack.c.h.b16 %v293
      %v579 = vunpack.c.l.b16 %v294
      %v580 = vunpack.c.h.b16 %v294
      %v581 = vunpack.c.l.b16 %v295
      %v582 = vunpack.c.h.b16 %v295
      %v583 = vunpack.c.l.b16 %v296
      %v584 = vunpack.c.h.b16 %v296
      %v585 = vunpack.c.l.b16 %v297
      %v586 = vunpack.c.h.b16 %v297
      %v587 = vunpack.c.l.b16 %v298
      %v588 = vunpack.c.h.b16 %v298
      %v589 = vunpack.c.l.b16 %v299
      %v590 = vunpack.c.h.b16 %v299
      %v591 = vunpack.c.l.b16 %v300
      %v592 = vunpack.c.h.b16 %v300
      %v593 = vunpack.c.l.b16 %v301
      %v594 = vunpack.c.h.b16 %v301
      %v595 = vunpack.c.l.b16 %v302
      %v596 = vunpack.c.h.b16 %v302
      %v597 = vunpack.c.l.b16 %v303
      %v598 = vunpack.c.h.b16 %v303
      %v599 = vunpack.c.l.b16 %v304
      %v600 = vunpack.c.h.b16 %v304
      %v601 = vunpack.c.l.b16 %v305
      %v602 = vunpack.c.h.b16 %v305
      %v603 = vunpack.c.l.b16 %v306
      %v604 = vunpack.c.h.b16 %v306
      %v605 = vunpack.c.l.b16 %v307
      %v606 = vunpack.c.h.b16 %v307
      %v607 = vunpack.c.l.b16 %v308
      %v608 = vunpack.c.h.b16 %v308
      %v609 = vunpack.c.l.b16 %v309
      %v610 = vunpack.c.h.b16 %v309
      %v611 = vunpack.c.l.b16 %v310
      %v612 = vunpack.c.h.b16 %v310
      %v613 = vunpack.c.l.b16 %v311
      %v614 = vunpack.c.h.b16 %v311
      %v615 = vunpack.c.l.b16 %v312
      %v616 = vunpack.c.h.b16 %v312
      %v617 = vunpack.c.l.b16 %v313
      %v618 = vunpack.c.h.b16 %v313
      %v619 = vunpack.c.l.b16 %v314
      %v620 = vunpack.c.h.b16 %v314
      %v621 = vunpack.c.l.b16 %v315
      %v622 = vunpack.c.h.b16 %v315
      %v623 = vunpack.c.l.b16 %v316
      %v624 = vunpack.c.h.b16 %v316
      %v625 = vunpack.c.l.b16 %v317
      %v626 = vunpack.c.h.b16 %v317
      %v627 = vunpack.c.l.b16 %v318
      %v628 = vunpack.c.h.b16 %v318
      %v629 = vunpack.c.l.b16 %v319
      %v630 = vunpack.c.h.b16 %v319
      %v631 = vunpack.c.l.b16 %v320
      %v632 = vunpack.c.h.b16 %v320
      %v633 = vunpack.c.l.b16 %v321
      %v634 = vunpack.c.h.b16 %v321
      %v635 = vunpack.c.l.b16 %v322
      %v636 = vunpack.c.h.b16 %v322
      %v637 = vunpack.c.l.b16 %v323
      %v638 = vunpack.c.h.b16 %v323
      %v639 = vunpack.c.l.b16 %v324
      %v640 = vunpack.c.h.b16 %v324
      %v641 = vunpack.c.l.b16 %v325
      %v642 = vunpack.c.h.b16 %v325
      %v643 = vunpack.c.l.b16 %v326
      %v644 = vunpack.c.h.b16 %v326
      %v645 = vunpack.c.l.b16 %v327
      %v646 = vunpack.c.h.b16 %v327
      %v647 = vunpack.c.l.b16 %v328
      %v648 = vunpack.c.h.b16 %v328
      %v649 = vunpack.c.l.b16 %v329
      %v650 = vunpack.c.h.b16 %v329
      %v651 = vunpack.c.l.b16 %v330
      %v652 = vunpack.c.h.b16 %v330
      %v653 = vunpack.c.l.b16 %v331
      %v654 = vunpack.c.h.b16 %v331
      %v655 = vunpack.c.l.b16 %v332
      %v656 = vunpack.c.h.b16 %v332
      %v657 = vunpack.c.l.b16 %v333
      %v658 = vunpack.c.h.b16 %v333
      %v659 = vunpack.c.l.b16 %v334
      %v660 = vunpack.c.h.b16 %v334
      %v661 = vunpack.c.l.b16 %v335
      %v662 = vunpack.c.h.b16 %v335
      %v663 = vunpack.c.l.b16 %v336
      %v664 = vunpack.c.h.b16 %v336
      %v665 = vunpack.c.l.b16 %v337
      %v666 = vunpack.c.h.b16 %v337
      %v667 = vunpack.c.l.b16 %v338
      %v668 = vunpack.c.h.b16 %v338
      %v669 = vunpack.c.l.b16 %v339
      %v670 = vunpack.c.h.b16 %v339
      %v671 = vunpack.c.l.b16 %v340
      %v672 = vunpack.c.h.b16 %v340
      %v673 = vunpack.c.l.b16 %v341
      %v674 = vunpack.c.h.b16 %v341
      %v675 = vunpack.c.l.b16 %v342
      %v676 = vunpack.c.h.b16 %v342
      %v677 = vunpack.c.l.b16 %v343
      %v678 = vunpack.c.h.b16 %v343
      %v679 = vunpack.c.l.b16 %v344
      %v680 = vunpack.c.h.b16 %v344
      %v681 = vunpack.c.l.b16 %v345
      %v682 = vunpack.c.h.b16 %v345
      %v683 = vunpack.c.l.b16 %v346
      %v684 = vunpack.c.h.b16 %v346
      %v685 = vunpack.c.l.b16 %v347
      %v686 = vunpack.c.h.b16 %v347
      %v687 = vunpack.c.l.b16 %v348
      %v688 = vunpack.c.h.b16 %v348
      %v689 = vunpack.c.l.b16 %v349
      %v690 = vunpack.c.h.b16 %v349
      %v691 = vunpack.c.l.b16 %v350
      %v692 = vunpack.c.h.b16 %v350
      %v693 = vunpack.c.l.b16 %v351
      %v694 = vunpack.c.h.b16 %v351
      %v695 = vunpack.c.l.b16 %v352
      %v696 = vunpack.c.h.b16 %v352
      %v697 = vunpack.c.l.b16 %v353
      %v698 = vunpack.c.h.b16 %v353
      %v699 = vunpack.c.l.b16 %v354
      %v700 = vunpack.c.h.b16 %v354
      %v701 = vunpack.c.l.b16 %v355
      %v702 = vunpack.c.h.b16 %v355
      %v703 = vunpack.c.l.b16 %v356
      %v704 = vunpack.c.h.b16 %v356
      %v705 = vunpack.c.l.b16 %v357
      %v706 = vunpack.c.h.b16 %v357
      %v707 = vunpack.c.l.b16 %v358
      %v708 = vunpack.c.h.b16 %v358
      %v709 = vunpack.c.l.b16 %v359
      %v710 = vunpack.c.h.b16 %v359
      %v711 = vunpack.c.l.b16 %v360
      %v712 = vunpack.c.h.b16 %v360
      %v713 = vunpack.c.l.b16 %v361
      %v714 = vunpack.c.h.b16 %v361
      %v715 = vunpack.c.l.b16 %v362
      %v716 = vunpack.c.h.b16 %v362
      %v717 = vunpack.c.l.b16 %v363
      %v718 = vunpack.c.h.b16 %v363
      %v719 = vunpack.c.l.b16 %v364
      %v720 = vunpack.c.h.b16 %v364
      %v721 = vunpack.c.l.b16 %v365
      %v722 = vunpack.c.h.b16 %v365
      %v723 = vunpack.c.l.b16 %v366
      %v724 = vunpack.c.h.b16 %v366
      %v725 = vunpack.c.l.b16 %v367
      %v726 = vunpack.c.h.b16 %v367
      %v727 = vunpack.c.l.b16 %v368
      %v728 = vunpack.c.h.b16 %v368
      %v729 = vunpack.c.l.b16 %v369
      %v730 = vunpack.c.h.b16 %v369
      %v731 = vunpack.c.l.b16 %v370
      %v732 = vunpack.c.h.b16 %v370
      %v733 = vunpack.c.l.b16 %v371
      %v734 = vunpack.c.h.b16 %v371
      %v735 = vunpack.c.l.b16 %v372
      %v736 = vunpack.c.h.b16 %v372
      %v737 = vunpack.c.l.b16 %v373
      %v738 = vunpack.c.h.b16 %v373
      %v739 = vunpack.c.l.b16 %v374
      %v740 = vunpack.c.h.b16 %v374
      %v741 = vunpack.c.l.b16 %v375
      %v742 = vunpack.c.h.b16 %v375
      %v743 = vunpack.c.l.b16 %v376
      %v744 = vunpack.c.h.b16 %v376
      %v745 = vunpack.c.l.b16 %v377
      %v746 = vunpack.c.h.b16 %v377
      %v747 = vunpack.c.l.b16 %v378
      %v748 = vunpack.c.h.b16 %v378
      %v749 = vunpack.c.l.b16 %v379
      %v750 = vunpack.c.h.b16 %v379
      %v751 = vunpack.c.l.b16 %v380
      %v752 = vunpack.c.h.b16 %v380
      %v753 = vunpack.c.l.b16 %v381
      %v754 = vunpack.c.h.b16 %v381
      %v755 = vunpack.c.l.b16 %v382
      %v756 = vunpack.c.h.b16 %v382
      %v757 = vunpack.c.l.b16 %v383
      %v758 = vunpack.c.h.b16 %v383
      %v759 = vunpack.c.l.b16 %v384
      %v760 = vunpack.c.h.b16 %v384
      %v761 = vunpack.c.l.b16 %v385
      %v762 = vunpack.c.h.b16 %v385
      %v763 = vunpack.c.l.b16 %v386
      %v764 = vunpack.c.h.b16 %v386
      %v765 = vunpack.c.l.b16 %v387
      %v766 = vunpack.c.h.b16 %v387
      %v767 = vunpack.c.l.b16 %v388
      %v768 = vunpack.c.h.b16 %v388
      %v769 = vunpack.c.l.b16 %v389
      %v770 = vunpack.c.h.b16 %v389
      %v771 = vunpack.c.l.b16 %v390
      %v772 = vunpack.c.h.b16 %v390
      %v773 = vunpack.c.l.b16 %v391
      %v774 = vunpack.c.h.b16 %v391
      %v775 = vunpack.c.l.b16 %v392
      %v776 = vunpack.c.h.b16 %v392
      %v777 = vpack.c.b16 %v529, %v521
      %v778 = vpack.c.b16 %v530, %v522
      %v779 = vpack.c.b16 %v531, %v523
      %v780 = vpack.c.b16 %v532, %v524
      %v781 = vpack.c.b16 %v533, %v525
      %v782 = vpack.c.b16 %v534, %v526
      %v783 = vpack.c.b16 %v535, %v527
      %v784 = vpack.c.b16 %v536, %v528
      %v785 = vpack.c.b16 %v545, %v537
      %v786 = vpack.c.b16 %v546, %v538
      %v787 = vpack.c.b16 %v547, %v539
      %v788 = vpack.c.b16 %v548, %v540
      %v789 = vpack.c.b16 %v549, %v541
      %v790 = vpack.c.b16 %v550, %v542
      %v791 = vpack.c.b16 %v551, %v543
      %v792 = vpack.c.b16 %v552, %v544
      %v793 = vpack.c.b16 %v561, %v553
      %v794 = vpack.c.b16 %v562, %v554
      %v795 = vpack.c.b16 %v563, %v555
      %v796 = vpack.c.b16 %v564, %v556
      %v797 = vpack.c.b16 %v565, %v557
      %v798 = vpack.c.b16 %v566, %v558
      %v799 = vpack.c.b16 %v567, %v559
      %v800 = vpack.c.b16 %v568, %v560
      %v801 = vpack.c.b16 %v577, %v569
      %v802 = vpack.c.b16 %v578, %v570
      %v803 = vpack.c.b16 %v579, %v571
      %v804 = vpack.c.b16 %v580, %v572
      %v805 = vpack.c.b16 %v581, %v573
      %v806 = vpack.c.b16 %v582, %v574
      %v807 = vpack.c.b16 %v583, %v575
      %v808 = vpack.c.b16 %v584, %v576
      %v809 = vpack.c.b16 %v593, %v585
      %v810 = vpack.c.b16 %v594, %v586
      %v811 = vpack.c.b16 %v595, %v587
      %v812 = vpack.c.b16 %v596, %v588
      %v813 = vpack.c.b16 %v597, %v589
      %v814 = vpack.c.b16 %v598, %v590
      %v815 = vpack.c.b16 %v599, %v591
      %v816 = vpack.c.b16 %v600, %v592
      %v817 = vpack.c.b16 %v609, %v601
      %v818 = vpack.c.b16 %v610, %v602
      %v819 = vpack.c.b16 %v611, %v603
      %v820 = vpack.c.b16 %v612, %v604
      %v821 = vpack.c.b16 %v613, %v605
      %v822 = vpack.c.b16 %v614, %v606
      %v823 = vpack.c.b16 %v615, %v607
      %v824 = vpack.c.b16 %v616, %v608
      %v825 = vpack.c.b16 %v625, %v617
      %v826 = vpack.c.b16 %v626, %v618
      %v827 = vpack.c.b16 %v627, %v619
      %v828 = vpack.c.b16 %v628, %v620
      %v829 = vpack.c.b16 %v629, %v621
      %v830 = vpack.c.b16 %v630, %v622
      %v831 = vpack.c.b16 %v631, %v623
      %v832 = vpack.c.b16 %v632, %v624
      %v833 = vpack.c.b16 %v641, %v633
      %v834 = vpack.c.b16 %v642, %v634
      %v835 = vpack.c.b16 %v643, %v635
      %v836 = vpack.c.b16 %v644, %v636
      %v837 = vpack.c.b16 %v645, %v637
      %v838 = vpack.c.b16 %v646, %v638
      %v839 = vpack.c.b16 %v647, %v639
      %v840 = vpack.c.b16 %v648, %v640
      %v841 = vpack.c.b16 %v657, %v649
      %v842 = vpack.c.b16 %v658, %v650
      %v843 = vpack.c.b16 %v659, %v651
      %v844 = vpack.c.b16 %v660, %v652
      %v845 = vpack.c.b16 %v661, %v653
      %v846 = vpack.c.b16 %v662, %v654
      %v847 = vpack.c.b16 %v663, %v655
      %v848 = vpack.c.b16 %v664, %v656
      %v849 = vpack.c.b16 %v673, %v665
      %v850 = vpack.c.b16 %v674, %v666
      %v851 = vpack.c.b16 %v675, %v667
      %v852 = vpack.c.b16 %v676, %v668
      %v853 = vpack.c.b16 %v677, %v669
      %v854 = vpack.c.b16 %v678, %v670
      %v855 = vpack.c.b16 %v679, %v671
      %v856 = vpack.c.b16 %v680, %v672
      %v857 = vpack.c.b16 %v689, %v681
      %v858 = vpack.c.b16 %v690, %v682
      %v859 = vpack.c.b16 %v691, %v683
      %v860 = vpack.c.b16 %v692, %v684
      %v861 = vpack.c.b16 %v693, %v685
      %v862 = vpack.c.b16 %v694, %v686
      %v863 = vpack.c.b16 %v695, %v687
      %v864 = vpack.c.b16 %v696, %v688
      %v865 = vpack.c.b16 %v705, %v697
      %v866 = vpack.c.b16 %v706, %v698
      %v867 = vpack.c.b16 %v707, %v699
      %v868 = vpack.c.b16 %v708, %v700
      %v869 = vpack.c.b16 %v709, %v701
      %v870 = vpack.c.b16 %v710, %v702
      %v871 = vpack.c.b16 %v711, %v703
      %v872 = vpack.c.b16 %v712, %v704
      %v873 = vpack.c.b16 %v721, %v713
      %v874 = vpack.c.b16 %v722, %v714
      %v875 = vpack.c.b16 %v723, %v715
      %v876 = vpack.c.b16 %v724, %v716
      %v877 = vpack.c.b16 %v725, %v717
      %v878 = vpack.c.b16 %v726, %v718
      %v879 = vpack.c.b16 %v727, %v719
      %v880 = vpack.c.b16 %v728, %v720
      %v881 = vpack.c.b16 %v737, %v729
      %v882 = vpack.c.b16 %v738, %v730
      %v883 = vpack.c.b16 %v739, %v731
      %v884 = vpack.c.b16 %v740, %v732
      %v885 = vpack.c.b16 %v741, %v733
      %v886 = vpack.c.b16 %v742, %v734
      %v887 = vpack.c.b16 %v743, %v735
      %v888 = vpack.c.b16 %v744, %v736
      %v889 = vpack.c.b16 %v753, %v745
      %v890 = vpack.c.b16 %v754, %v746
      %v891 = vpack.c.b16 %v755, %v747
      %v892 = vpack.c.b16 %v756, %v748
      %v893 = vpack.c.b16 %v757, %v749
      %v894 = vpack.c.b16 %v758, %v750
      %v895 = vpack.c.b16 %v759, %v751
      %v896 = vpack.c.b16 %v760, %v752
      %v897 = vpack.c.b16 %v769, %v761
      %v898 = vpack.c.b16 %v770, %v762
      %v899 = vpack.c.b16 %v771, %v763
      %v900 = vpack.c.b16 %v772, %v764
      %v901 = vpack.c.b16 %v773, %v765
      %v902 = vpack.c.b16 %v774, %v766
      %v903 = vpack.c.b16 %v775, %v767
      %v904 = vpack.c.b16 %v776, %v768
      %1033 = vmatprep.subr.bf16.mxu0 %v834
      %1034 = vmatpush1.bf16.msra.mxu0 %v833
      %1035 = vmatprep.subr.bf16.mxu0 %v826
      %1036 = vmatpush1.bf16.msra.mxu0 %v825
      %1037 = vmatprep.subr.bf16.mxu0 %v818
      %1038 = vmatpush1.bf16.msra.mxu0 %v817
      %1039 = vmatprep.subr.bf16.mxu0 %v810
      %1040 = vmatpush1.bf16.msra.mxu0 %v809
      %1041 = vmatprep.subr.bf16.mxu0 %v802
      %1042 = vmatpush1.bf16.msra.mxu0 %v801
      %1043 = vmatprep.subr.bf16.mxu0 %v794
      %1044 = vmatpush1.bf16.msra.mxu0 %v793
      %1045 = vmatprep.subr.bf16.mxu0 %v786
      %1046 = vmatpush1.bf16.msra.mxu0 %v785
      %1047 = vmatprep.subr.bf16.mxu0 %v778
      %1048 = vmatpush1.bf16.msra.mxu0 %v777
      %1049 = vmatprep.subr.bf16.mxu0 %v898
      %1050 = vmatpush2.bf16.msra.mxu0 %v897
      %1051 = vmatprep.subr.bf16.mxu0 %v890
      %1052 = vmatpush2.bf16.msra.mxu0 %v889
      %1053 = vmatprep.subr.bf16.mxu0 %v882
      %1054 = vmatpush2.bf16.msra.mxu0 %v881
      %1055 = vmatprep.subr.bf16.mxu0 %v874
      %1056 = vmatpush2.bf16.msra.mxu0 %v873
      %1057 = vmatprep.subr.bf16.mxu0 %v866
      %1058 = vmatpush2.bf16.msra.mxu0 %v865
      %1059 = vmatprep.subr.bf16.mxu0 %v858
      %1060 = vmatpush2.bf16.msra.mxu0 %v857
      %1061 = vmatprep.subr.bf16.mxu0 %v850
      %1062 = vmatpush2.bf16.msra.mxu0 %v849
      %1063 = vmatprep.subr.bf16.mxu0 %v842
      %1064 = vmatpush2.bf16.msra.mxu0 %v841
      %1065 = vmatprep.mubr.bf16.mxu0 %v264
      %1066 = vmatmul.mubr.bf16.gmra.mxu0 %v263
      %v1067 = vpop.f32.mrf.mxu0
      %v1068 = vadd.f32 0.0, %v1067
      %v1069 = vpop.f32.mrf.mxu0
      %v1070 = vadd.f32 0.0, %v1069
      %v1071 = vpop.f32.mrf.mxu0
      %v1072 = vpop.f32.mrf.mxu0
      %1073 = vdwg.mxu0
      %1074 = vmatprep.subr.bf16.mxu0 %v836
      %1075 = vmatpush1.bf16.msra.mxu0 %v835
      %1076 = vmatprep.subr.bf16.mxu0 %v828
      %1077 = vmatpush1.bf16.msra.mxu0 %v827
      %1078 = vmatprep.subr.bf16.mxu0 %v820
      %1079 = vmatpush1.bf16.msra.mxu0 %v819
      %1080 = vmatprep.subr.bf16.mxu0 %v812
      %1081 = vmatpush1.bf16.msra.mxu0 %v811
      %1082 = vmatprep.subr.bf16.mxu0 %v804
      %1083 = vmatpush1.bf16.msra.mxu0 %v803
      %1084 = vmatprep.subr.bf16.mxu0 %v796
      %1085 = vmatpush1.bf16.msra.mxu0 %v795
      %1086 = vmatprep.subr.bf16.mxu0 %v788
      %1087 = vmatpush1.bf16.msra.mxu0 %v787
      %1088 = vmatprep.subr.bf16.mxu0 %v780
      %1089 = vmatpush1.bf16.msra.mxu0 %v779
      %1090 = vmatprep.subr.bf16.mxu0 %v900
      %1091 = vmatpush2.bf16.msra.mxu0 %v899
      %1092 = vmatprep.subr.bf16.mxu0 %v892
      %1093 = vmatpush2.bf16.msra.mxu0 %v891
      %1094 = vmatprep.subr.bf16.mxu0 %v884
      %1095 = vmatpush2.bf16.msra.mxu0 %v883
      %1096 = vmatprep.subr.bf16.mxu0 %v876
      %1097 = vmatpush2.bf16.msra.mxu0 %v875
      %1098 = vmatprep.subr.bf16.mxu0 %v868
      %1099 = vmatpush2.bf16.msra.mxu0 %v867
      %1100 = vmatprep.subr.bf16.mxu0 %v860
      %1101 = vmatpush2.bf16.msra.mxu0 %v859
      %1102 = vmatprep.subr.bf16.mxu0 %v852
      %1103 = vmatpush2.bf16.msra.mxu0 %v851
      %1104 = vmatprep.subr.bf16.mxu0 %v844
      %1105 = vmatpush2.bf16.msra.mxu0 %v843
      %1106 = vmatprep.mubr.bf16.mxu0 %v264
      %1107 = vmatmul.mubr.bf16.gmra.mxu0 %v263
      %v1108 = vpop.f32.mrf.mxu0
      %v1109 = vadd.f32 0.0, %v1108
      %v1110 = vpop.f32.mrf.mxu0
      %v1111 = vadd.f32 0.0, %v1110
      %v1112 = vpop.f32.mrf.mxu0
      %v1113 = vpop.f32.mrf.mxu0
      %1114 = vdwg.mxu0
      %1115 = vmatprep.subr.bf16.mxu0 %v838
      %1116 = vmatpush1.bf16.msra.mxu0 %v837
      %1117 = vmatprep.subr.bf16.mxu0 %v830
      %1118 = vmatpush1.bf16.msra.mxu0 %v829
      %1119 = vmatprep.subr.bf16.mxu0 %v822
      %1120 = vmatpush1.bf16.msra.mxu0 %v821
      %1121 = vmatprep.subr.bf16.mxu0 %v814
      %1122 = vmatpush1.bf16.msra.mxu0 %v813
      %1123 = vmatprep.subr.bf16.mxu0 %v806
      %1124 = vmatpush1.bf16.msra.mxu0 %v805
      %1125 = vmatprep.subr.bf16.mxu0 %v798
      %1126 = vmatpush1.bf16.msra.mxu0 %v797
      %1127 = vmatprep.subr.bf16.mxu0 %v790
      %1128 = vmatpush1.bf16.msra.mxu0 %v789
      %1129 = vmatprep.subr.bf16.mxu0 %v782
      %1130 = vmatpush1.bf16.msra.mxu0 %v781
      %1131 = vmatprep.subr.bf16.mxu0 %v902
      %1132 = vmatpush2.bf16.msra.mxu0 %v901
      %1133 = vmatprep.subr.bf16.mxu0 %v894
      %1134 = vmatpush2.bf16.msra.mxu0 %v893
      %1135 = vmatprep.subr.bf16.mxu0 %v886
      %1136 = vmatpush2.bf16.msra.mxu0 %v885
      %1137 = vmatprep.subr.bf16.mxu0 %v878
      %1138 = vmatpush2.bf16.msra.mxu0 %v877
      %1139 = vmatprep.subr.bf16.mxu0 %v870
      %1140 = vmatpush2.bf16.msra.mxu0 %v869
      %1141 = vmatprep.subr.bf16.mxu0 %v862
      %1142 = vmatpush2.bf16.msra.mxu0 %v861
      %1143 = vmatprep.subr.bf16.mxu0 %v854
      %1144 = vmatpush2.bf16.msra.mxu0 %v853
      %1145 = vmatprep.subr.bf16.mxu0 %v846
      %1146 = vmatpush2.bf16.msra.mxu0 %v845
      %1147 = vmatprep.mubr.bf16.mxu0 %v264
      %1148 = vmatmul.mubr.bf16.gmra.mxu0 %v263
      %v1149 = vpop.f32.mrf.mxu0
      %v1150 = vadd.f32 0.0, %v1149
      %v1151 = vpop.f32.mrf.mxu0
      %v1152 = vadd.f32 0.0, %v1151
      %v1153 = vpop.f32.mrf.mxu0
      %v1154 = vpop.f32.mrf.mxu0
      %1155 = vdwg.mxu0
      %1156 = vmatprep.subr.bf16.mxu0 %v840
      %1157 = vmatpush1.bf16.msra.mxu0 %v839
      %1158 = vmatprep.subr.bf16.mxu0 %v832
      %1159 = vmatpush1.bf16.msra.mxu0 %v831
      %1160 = vmatprep.subr.bf16.mxu0 %v824
      %1161 = vmatpush1.bf16.msra.mxu0 %v823
      %1162 = vmatprep.subr.bf16.mxu0 %v816
      %1163 = vmatpush1.bf16.msra.mxu0 %v815
      %1164 = vmatprep.subr.bf16.mxu0 %v808
      %1165 = vmatpush1.bf16.msra.mxu0 %v807
      %1166 = vmatprep.subr.bf16.mxu0 %v800
      %1167 = vmatpush1.bf16.msra.mxu0 %v799
      %1168 = vmatprep.subr.bf16.mxu0 %v792
      %1169 = vmatpush1.bf16.msra.mxu0 %v791
      %1170 = vmatprep.subr.bf16.mxu0 %v784
      %1171 = vmatpush1.bf16.msra.mxu0 %v783
      %1172 = vmatprep.subr.bf16.mxu0 %v904
      %1173 = vmatpush2.bf16.msra.mxu0 %v903
      %1174 = vmatprep.subr.bf16.mxu0 %v896
      %1175 = vmatpush2.bf16.msra.mxu0 %v895
      %1176 = vmatprep.subr.bf16.mxu0 %v888
      %1177 = vmatpush2.bf16.msra.mxu0 %v887
      %1178 = vmatprep.subr.bf16.mxu0 %v880
      %1179 = vmatpush2.bf16.msra.mxu0 %v879
      %1180 = vmatprep.subr.bf16.mxu0 %v872
      %1181 = vmatpush2.bf16.msra.mxu0 %v871
      %1182 = vmatprep.subr.bf16.mxu0 %v864
      %1183 = vmatpush2.bf16.msra.mxu0 %v863
      %1184 = vmatprep.subr.bf16.mxu0 %v856
      %1185 = vmatpush2.bf16.msra.mxu0 %v855
      %1186 = vmatprep.subr.bf16.mxu0 %v848
      %1187 = vmatpush2.bf16.msra.mxu0 %v847
      %1188 = vmatprep.mubr.bf16.mxu0 %v264
      %1189 = vmatmul.mubr.bf16.gmra.mxu0 %v263
      %v1190 = vpop.f32.mrf.mxu0
      %v1191 = vadd.f32 0.0, %v1190
      %v1192 = vpop.f32.mrf.mxu0
      %v1193 = vadd.f32 0.0, %v1192
      %v1194 = vpop.f32.mrf.mxu0
      %v1195 = vpop.f32.mrf.mxu0
      %1196 = vdwg.mxu0
      %1197 = vst [vmem:[%s197] sm:$0xff] %v1068
      %1198 = vst [vmem:[%s197 + $0x8] sm:$0xff] %v1070
      %1199 = vst [vmem:[%s197 + $0x10] sm:$0xff] %v1109
      %1200 = vst [vmem:[%s197 + $0x18] sm:$0xff] %v1111
      %1201 = vst [vmem:[%s197 + $0x20] sm:$0xff] %v1150
      %1202 = vst [vmem:[%s197 + $0x28] sm:$0xff] %v1152
      %1203 = vst [vmem:[%s197 + $0x30] sm:$0xff] %v1191
      %1204 = vst [vmem:[%s197 + $0x38] sm:$0xff] %v1193
      %p1205 = scmp.lt.s32.totalorder %s15, 1
      %s1206 = scalar_select %p1205, %s15, 1
      %s1207 = smul.addr %s1206, 8
      %s1208 = smul.addr %s1207, 8
      %s1209 = scalar_lea.vmem %s4, %s1208
      // Predicated region
      $region37: #{network_forward.3} parent=35 // pred_check
        %p1210 = pneg %p122
      $region38: #{network_forward.3} parent=35 // pred_check_branch
        %1212 = sbr.rel (%p1210) target = $region40
      $region39: #{network_forward.3} parent=35 // pred_region
        _
      $region40: #{network_forward.3} parent=35 // pred_fallthru
        _
    $region36: #{network_forward.3} parent=5 // pred_fallthru
      _
    %p1213 = scmp.le.s32.totalorder 2, %s10
    // Predicated region
    $region41: #{network_forward.3} parent=5 // pred_check
      %p1214 = pneg %p1213
    $region42: #{network_forward.3} parent=5 // pred_check_branch
      %1216 = sbr.rel (%p1214) target = $region44
    $region43: #{network_forward.3} parent=5 // pred_region
      %s1217 = ssub.s32 %s10, 2
      // Predicated region
      $region45: #{network_forward.3} parent=43 // pred_check
        %p1218 = pneg %p128
      $region46: #{network_forward.3} parent=43 // pred_check_branch
        %1220 = sbr.rel (%p1218) target = $region48
      $region47: #{network_forward.3} parent=43 // pred_region
        %p1221 = scmp.lt.s32.totalorder %s16, 1
        %s1222 = scalar_select %p1221, %s16, 1
        %s1223 = smul.addr %s1222, 8
        %s1224 = smul.addr %s1223, 8
        %s1225 = scalar_lea.vmem %s4, %s1224
      $region48: #{network_forward.3} parent=43 // pred_fallthru
        _
    $region44: #{network_forward.3} parent=5 // pred_fallthru
      _
  $region6: #{network_forward.3} parent=0 // loop_footer
    %s14 = sadd.s32 1, %s10
  $region7: #{network_forward.3} parent=0 // loop_footer_branch
    %9 = sbr.rel target = $region3
  $region8: #{network_forward.3} parent=0 // loop_exit
    _

</llo_original>
